<compile_context>
chip_gen: v5e
topology: v5e:2x2
jax: 0.10.0
libtpu: 0.0.40
codegen_flags: <defaults>
</compile_context>

<pallas_src>
import functools

import jax
import jax.numpy as jnp
from jax.experimental import pallas as pl
from jax.experimental.pallas import tpu as pltpu


# ----------------------------- Pallas kernel --------------------------------
def _conv_bn_relu_kernel(x_ref, w_ref, b_ref, o_ref, *, K, S, D, TH, HT, Wout):
    """One grid step: one batch item, TH output rows, all Wout output columns.

    x_ref: (1, Hp, Wp, Cin)         bf16 zero-padded NHWC input (whole image)
    w_ref: (K*K*Cin, Cout_pad)      bf16 conv weight with BN scale folded in
    b_ref: (1, Cout_pad)            f32 BN shift (beta - mean*scale), zero-padded
    o_ref: (1, TH, Wout, Cout)      bf16 output tile (true Cout, no lane padding)
    """
    Cin = x_ref.shape[-1]
    Cout_p = w_ref.shape[-1]
    Cout = o_ref.shape[-1]

    if HT == 1:
        row0 = 0                                       # fully static indexing path
    else:
        # output-row-tile offset in *input* rows (stride-aware; fixes S>1 bug)
        row0 = pl.multiple_of(pl.program_id(1) * (TH * S), TH * S)

    # In-kernel im2col: one strided 3-D slice per tap, concatenated along the
    # contraction (lane) axis -> single deep matmul on the MXU.
    taps = []
    for kh in range(K):
        r = row0 + kh * D
        rsl = pl.ds(r, TH) if S == 1 else pl.ds(r, TH, stride=S)
        for kw in range(K):
            csl = pl.ds(kw * D, Wout) if S == 1 else pl.ds(kw * D, Wout, stride=S)
            taps.append(x_ref[0, rsl, csl, :])         # (TH, Wout, Cin) bf16
    lhs = jnp.concatenate(taps, axis=-1)               # (TH, Wout, K*K*Cin)
    lhs = lhs.reshape(TH * Wout, K * K * Cin)

    acc = jnp.dot(lhs, w_ref[...], preferred_element_type=jnp.float32)
    y = jnp.maximum(acc + b_ref[...], 0.0)             # BN shift + ReLU (f32)
    if Cout != Cout_p:
        y = y[:, :Cout]                                # drop padded channels
    o_ref[0] = y.reshape(TH, Wout, Cout).astype(o_ref.dtype)


def _fused_conv_bn_relu(x_pad, w_flat, bias_p, *, K, S, D, Hout, Wout, TH, Cout,
                        vmem_limit):
    N, Hp, Wp, Cin = x_pad.shape
    KKC, Cout_p = w_flat.shape
    assert KKC == K * K * Cin and Hout % TH == 0
    HT = Hout // TH

    kernel = functools.partial(
        _conv_bn_relu_kernel, K=K, S=S, D=D, TH=TH, HT=HT, Wout=Wout)

    return pl.pallas_call(
        kernel,
        out_shape=jax.ShapeDtypeStruct((N, Hout, Wout, Cout), jnp.bfloat16),
        grid_spec=pltpu.PrefetchScalarGridSpec(
            num_scalar_prefetch=0,
            grid=(N, HT),
            in_specs=[
                # whole padded image per batch item; block index depends only on
                # n, so it crosses HBM exactly once per batch item.
                pl.BlockSpec((1, Hp, Wp, Cin), lambda n, i: (n, 0, 0, 0)),
                # constant (scale-folded) weight / bias blocks
                pl.BlockSpec((KKC, Cout_p), lambda n, i: (0, 0)),
                pl.BlockSpec((1, Cout_p), lambda n, i: (0, 0)),
            ],
            out_specs=pl.BlockSpec((1, TH, Wout, Cout), lambda n, i: (n, i, 0, 0)),
        ),
        compiler_params=pltpu.CompilerParams(
            dimension_semantics=("parallel", "parallel"),
            vmem_limit_bytes=vmem_limit,
        ),
    )(x_pad, w_flat, bias_p)


# ------------------------------ Tiling helpers -------------------------------
def _vmem_limit_bytes():
    """~96 MiB on v5e/v6e (128 MiB physical), ~48 MiB on v7x (64 MiB physical)."""
    try:
        cap = int(pltpu.get_tpu_info().vmem_capacity_bytes)
    except Exception:
        cap = 128 * 1024 * 1024
    return int(min(cap * 3 // 4, 96 * 1024 * 1024))


def _pick_row_tile(Hout, Wout, max_rows, min_row_tiles=1):
    """Largest divisor TH of Hout with TH*Wout <= max_rows.

    Prefers sublane/MXU-friendly tiles (TH*Wout % 8 == 0) but never falls back
    to a whole-image tile: worst case TH == 1 (block second-to-last dim is the
    full Wout, which is always a legal block shape).
    """
    limit = max(1, Hout // min_row_tiles) if min_row_tiles > 1 else Hout
    best, best_aligned = 1, None
    for th in range(1, limit + 1):
        if Hout % th or th * Wout > max_rows:
            continue
        best = th
        if (th * Wout) % 8 == 0:
            best_aligned = th
    return best_aligned if best_aligned is not None else best


# ------------------------------- Module -------------------------------------
class BasicConv2dPallas:
    """Mirrors model/MEM.py::BasicConv2d forward (Conv2d(bias=False) + BN + ReLU).

    BatchNorm is applied in eval mode (running statistics) and folded into the
    conv weights (scale) and a per-channel bias (shift) at construction time;
    only the fused conv+bias+ReLU kernel runs per forward pass.
    """

    def __init__(self, in_planes, out_planes, kernel_size, stride=1,
                 padding=0, dilation=1, *, key):
        self.in_planes = in_planes
        self.out_planes = out_planes
        self.kernel_size = kernel_size
        self.stride = stride
        self.padding = padding
        self.dilation = dilation

        k_w, k_g, k_b, k_m, k_v = jax.random.split(key, 5)
        # Conv weight, PyTorch layout: (Cout, Cin, KH, KW)
        fan_in = in_planes * kernel_size * kernel_size
        bound = 1.0 / (fan_in ** 0.5)
        self.weight = jax.random.uniform(
            k_w, (out_planes, in_planes, kernel_size, kernel_size),
            minval=-bound, maxval=bound, dtype=jnp.float32)
        # BatchNorm parameters / running stats (deterministic, non-trivial).
        self.gamma = 1.0 + 0.1 * jax.random.normal(k_g, (out_planes,), jnp.float32)
        self.beta = 0.1 * jax.random.normal(k_b, (out_planes,), jnp.float32)
        self.running_mean = 0.1 * jax.random.normal(k_m, (out_planes,), jnp.float32)
        self.running_var = 1.0 + 0.1 * jax.random.uniform(k_v, (out_planes,),
                                                          dtype=jnp.float32)
        self.eps = 1e-5

        # ---- fold BN (eval) into weight scale + bias; cache kernel operands ----
        K = kernel_size
        scale = self.gamma / jnp.sqrt(self.running_var + self.eps)
        self.bn_scale = scale
        self.bn_bias = self.beta - self.running_mean * scale

        Cout_p = ((out_planes + 127) // 128) * 128      # lane-dense MXU N-dim
        w_folded = self.weight * scale[:, None, None, None]
        # (Cout, Cin, K, K) -> (K, K, Cin, Cout) -> (K*K*Cin, Cout) -> pad Cout
        w_flat = jnp.transpose(w_folded, (2, 3, 1, 0)).reshape(K * K * in_planes,
                                                               out_planes)
        self.w_flat = jnp.pad(
            w_flat, ((0, 0), (0, Cout_p - out_planes))).astype(jnp.bfloat16)
        self.bias_p = jnp.pad(self.bn_bias, (0, Cout_p - out_planes)
                              ).reshape(1, Cout_p).astype(jnp.float32)
        self.cout_p = Cout_p
        self.vmem_limit = _vmem_limit_bytes()

    def forward_nhwc(self, x_nhwc):
        """NHWC in (any float dtype) -> NHWC bf16 out.  Preferred between layers."""
        N, H, W, Cin = x_nhwc.shape
        assert Cin == self.in_planes
        K, S, P, D = self.kernel_size, self.stride, self.padding, self.dilation
        Hout = (H + 2 * P - D * (K - 1) - 1) // S + 1
        Wout = (W + 2 * P - D * (K - 1) - 1) // S + 1

        x_pad = jnp.pad(x_nhwc.astype(jnp.bfloat16),
                        ((0, 0), (P, P), (P, P), (0, 0)))

        max_rows = 1024 if self.vmem_limit >= 64 * 1024 * 1024 else 512
        TH = _pick_row_tile(Hout, Wout, max_rows,
                            min_row_tiles=2 if N == 1 else 1)
        return _fused_conv_bn_relu(
            x_pad, self.w_flat, self.bias_p, K=K, S=S, D=D,
            Hout=Hout, Wout=Wout, TH=TH, Cout=self.out_planes,
            vmem_limit=self.vmem_limit)

    def __call__(self, x):
        # NCHW f32 in/out (PyTorch-module parity).  Chained layers should use
        # forward_nhwc directly to avoid the transposes / f32 cast.
        out_nhwc = self.forward_nhwc(jnp.transpose(x, (0, 2, 3, 1)))
        return jnp.transpose(out_nhwc, (0, 3, 1, 2)).astype(jnp.float32)


# ------------------------------- Main ----------------------------------------
if __name__ == "__main__":
    key = jax.random.PRNGKey(0)
    k_x, k_mod = jax.random.split(key)

    N, Cin, H, W = 2, 4, 16, 16
    Cout, Ksz, stride, pad, dil = 8, 3, 1, 1, 1

    x = jax.random.normal(k_x, (N, Cin, H, W), dtype=jnp.float32)
    mod = BasicConv2dPallas(Cin, Cout, Ksz, stride=stride, padding=pad,
                            dilation=dil, key=k_mod)

    out = jax.block_until_ready(mod(x))
    assert out.shape == (N, Cout, H, W), out.shape

    # Reference 1: matched precision (bf16 operands, f32 accumulation) — the math
    # the kernel performs (plus its final bf16 output cast) -> tight tolerance.
    scale = mod.bn_scale
    bias = mod.bn_bias
    w_folded_bf16 = (mod.weight * scale[:, None, None, None]).astype(jnp.bfloat16)
    ref_conv = jax.lax.conv_general_dilated(
        x.astype(jnp.bfloat16), w_folded_bf16,
        window_strides=(stride, stride), padding=[(pad, pad), (pad, pad)],
        rhs_dilation=(dil, dil), dimension_numbers=("NCHW", "OIHW", "NCHW"),
        preferred_element_type=jnp.float32)
    ref = jnp.maximum(ref_conv + bias.reshape(1, Cout, 1, 1), 0.0)
    assert jnp.allclose(out, ref, atol=3e-2, rtol=3e-2), float(
        jnp.max(jnp.abs(out - ref)))

    # Reference 2: full-f32 module math (Conv + BN(eval) + ReLU); loose tolerance
    # accounts only for the deliberate bf16 casts of operands and output.
    ref_f32 = jax.lax.conv_general_dilated(
        x, mod.weight, window_strides=(stride, stride),
        padding=[(pad, pad), (pad, pad)], rhs_dilation=(dil, dil),
        dimension_numbers=("NCHW", "OIHW", "NCHW"))
    ref_f32 = jnp.maximum(ref_f32 * scale.reshape(1, Cout, 1, 1)
                          + bias.reshape(1, Cout, 1, 1), 0.0)
    assert jnp.allclose(out, ref_f32, atol=0.15, rtol=0.15), float(
        jnp.max(jnp.abs(out - ref_f32)))

    print("KERNEL_OK")
</pallas_src>

<mosaic_0001>
module attributes {stable_mosaic.version = 11 : i64} {
  func.func @_conv_bn_relu_kernel(%arg0: i32, %arg1: i32, %arg2: memref<1x18x18x4xbf16, #tpu.memory_space<vmem>>, %arg3: memref<36x128xbf16, #tpu.memory_space<vmem>>, %arg4: memref<1x128xf32, #tpu.memory_space<vmem>>, %arg5: memref<1x16x16x8xbf16, #tpu.memory_space<vmem>>) attributes {dimension_semantics = [#tpu.dimension_semantics<parallel>, #tpu.dimension_semantics<parallel>], iteration_bounds = array<i64: 2, 1>, scalar_prefetch = 0 : i64, scratch_operands = 0 : i64, tpu.core_type = #tpu.core_type<tc>, window_params = [{transform_indices = @transform_0, window_bounds = array<i64: 1, 18, 18, 4>}, {pipeline_mode = #tpu.pipeline_mode<synchronous>, transform_indices = @transform_1, window_bounds = array<i64: 36, 128>}, {pipeline_mode = #tpu.pipeline_mode<synchronous>, transform_indices = @transform_2, window_bounds = array<i64: 1, 128>}, {transform_indices = @transform_3, window_bounds = array<i64: 1, 16, 16, 8>}]} {
    %c0 = arith.constant 0 : index
    %c0_0 = arith.constant 0 : index
    %c0_1 = arith.constant 0 : index
    %c0_2 = arith.constant 0 : index
    %0 = vector.load %arg2[%c0, %c0_0, %c0_1, %c0_2] : memref<1x18x18x4xbf16, #tpu.memory_space<vmem>>, vector<1x16x16x4xbf16>
    %1 = vector.shape_cast %0 : vector<1x16x16x4xbf16> to vector<16x16x4xbf16>
    %c0_3 = arith.constant 0 : index
    %c0_4 = arith.constant 0 : index
    %c1 = arith.constant 1 : index
    %c0_5 = arith.constant 0 : index
    %2 = vector.load %arg2[%c0_3, %c0_4, %c1, %c0_5] : memref<1x18x18x4xbf16, #tpu.memory_space<vmem>>, vector<1x16x16x4xbf16>
    %3 = vector.shape_cast %2 : vector<1x16x16x4xbf16> to vector<16x16x4xbf16>
    %c0_6 = arith.constant 0 : index
    %c0_7 = arith.constant 0 : index
    %c2 = arith.constant 2 : index
    %c0_8 = arith.constant 0 : index
    %4 = vector.load %arg2[%c0_6, %c0_7, %c2, %c0_8] : memref<1x18x18x4xbf16, #tpu.memory_space<vmem>>, vector<1x16x16x4xbf16>
    %5 = vector.shape_cast %4 : vector<1x16x16x4xbf16> to vector<16x16x4xbf16>
    %c0_9 = arith.constant 0 : index
    %c1_10 = arith.constant 1 : index
    %c0_11 = arith.constant 0 : index
    %c0_12 = arith.constant 0 : index
    %6 = vector.load %arg2[%c0_9, %c1_10, %c0_11, %c0_12] : memref<1x18x18x4xbf16, #tpu.memory_space<vmem>>, vector<1x16x16x4xbf16>
    %7 = vector.shape_cast %6 : vector<1x16x16x4xbf16> to vector<16x16x4xbf16>
    %c0_13 = arith.constant 0 : index
    %c1_14 = arith.constant 1 : index
    %c1_15 = arith.constant 1 : index
    %c0_16 = arith.constant 0 : index
    %8 = vector.load %arg2[%c0_13, %c1_14, %c1_15, %c0_16] : memref<1x18x18x4xbf16, #tpu.memory_space<vmem>>, vector<1x16x16x4xbf16>
    %9 = vector.shape_cast %8 : vector<1x16x16x4xbf16> to vector<16x16x4xbf16>
    %c0_17 = arith.constant 0 : index
    %c1_18 = arith.constant 1 : index
    %c2_19 = arith.constant 2 : index
    %c0_20 = arith.constant 0 : index
    %10 = vector.load %arg2[%c0_17, %c1_18, %c2_19, %c0_20] : memref<1x18x18x4xbf16, #tpu.memory_space<vmem>>, vector<1x16x16x4xbf16>
    %11 = vector.shape_cast %10 : vector<1x16x16x4xbf16> to vector<16x16x4xbf16>
    %c0_21 = arith.constant 0 : index
    %c2_22 = arith.constant 2 : index
    %c0_23 = arith.constant 0 : index
    %c0_24 = arith.constant 0 : index
    %12 = vector.load %arg2[%c0_21, %c2_22, %c0_23, %c0_24] : memref<1x18x18x4xbf16, #tpu.memory_space<vmem>>, vector<1x16x16x4xbf16>
    %13 = vector.shape_cast %12 : vector<1x16x16x4xbf16> to vector<16x16x4xbf16>
    %c0_25 = arith.constant 0 : index
    %c2_26 = arith.constant 2 : index
    %c1_27 = arith.constant 1 : index
    %c0_28 = arith.constant 0 : index
    %14 = vector.load %arg2[%c0_25, %c2_26, %c1_27, %c0_28] : memref<1x18x18x4xbf16, #tpu.memory_space<vmem>>, vector<1x16x16x4xbf16>
    %15 = vector.shape_cast %14 : vector<1x16x16x4xbf16> to vector<16x16x4xbf16>
    %c0_29 = arith.constant 0 : index
    %c2_30 = arith.constant 2 : index
    %c2_31 = arith.constant 2 : index
    %c0_32 = arith.constant 0 : index
    %16 = vector.load %arg2[%c0_29, %c2_30, %c2_31, %c0_32] : memref<1x18x18x4xbf16, #tpu.memory_space<vmem>>, vector<1x16x16x4xbf16>
    %17 = vector.shape_cast %16 : vector<1x16x16x4xbf16> to vector<16x16x4xbf16>
    %18 = tpu.concatenate %1, %3, %5, %7, %9, %11, %13, %15, %17 in 2 : vector<16x16x4xbf16>, vector<16x16x4xbf16>, vector<16x16x4xbf16>, vector<16x16x4xbf16>, vector<16x16x4xbf16>, vector<16x16x4xbf16>, vector<16x16x4xbf16>, vector<16x16x4xbf16>, vector<16x16x4xbf16> -> vector<16x16x36xbf16>
    %19 = vector.shape_cast %18 : vector<16x16x36xbf16> to vector<256x36xbf16>
    %c0_33 = arith.constant 0 : index
    %c0_34 = arith.constant 0 : index
    %20 = vector.load %arg3[%c0_33, %c0_34] : memref<36x128xbf16, #tpu.memory_space<vmem>>, vector<36x128xbf16>
    %cst = arith.constant dense<0.000000e+00> : vector<256x128xf32>
    %21 = tpu.matmul %19, %20, %cst {dimension_numbers = #tpu.dot_dimension_numbers<[1], [0], [0], [1], [0, 0, 1, 1], [], []>} : vector<256x36xbf16>, vector<36x128xbf16>, vector<256x128xf32> -> vector<256x128xf32>
    %c0_35 = arith.constant 0 : index
    %c0_36 = arith.constant 0 : index
    %22 = vector.load %arg4[%c0_35, %c0_36] : memref<1x128xf32, #tpu.memory_space<vmem>>, vector<1x128xf32>
    %23 = vector.broadcast %22 : vector<1x128xf32> to vector<256x128xf32>
    %24 = arith.addf %21, %23 : vector<256x128xf32>
    %cst_37 = arith.constant 0.000000e+00 : f32
    %25 = vector.broadcast %cst_37 : f32 to vector<256x128xf32>
    %26 = arith.maximumf %24, %25 : vector<256x128xf32>
    %27 = vector.extract_strided_slice %26 {offsets = [0, 0], sizes = [256, 8], strides = [1, 1]} : vector<256x128xf32> to vector<256x8xf32>
    %28 = vector.shape_cast %27 : vector<256x8xf32> to vector<16x16x8xf32>
    %29 = arith.truncf %28 : vector<16x16x8xf32> to vector<16x16x8xbf16>
    %c0_38 = arith.constant 0 : index
    %c0_39 = arith.constant 0 : index
    %c0_40 = arith.constant 0 : index
    %c0_41 = arith.constant 0 : index
    %30 = vector.load %arg5[%c0_38, %c0_39, %c0_40, %c0_41] : memref<1x16x16x8xbf16, #tpu.memory_space<vmem>>, vector<1x16x16x8xbf16>
    %31 = vector.shape_cast %30 : vector<1x16x16x8xbf16> to vector<16x16x8xbf16>
    %32 = vector.shape_cast %29 : vector<16x16x8xbf16> to vector<1x16x16x8xbf16>
    tpu.vector_store %arg5[%c0_38, %c0_39, %c0_40, %c0_41], %32 {strides = array<i32>} : memref<1x16x16x8xbf16, #tpu.memory_space<vmem>>, vector<1x16x16x8xbf16>,
    return
  }
  func.func @transform_0(%arg0: i32, %arg1: i32) -> (i32, i32, i32, i32) {
    %c0_i32 = arith.constant 0 : i32
    %c0_i32_0 = arith.constant 0 : i32
    %c0_i32_1 = arith.constant 0 : i32
    %c0_i32_2 = arith.constant 0 : i32
    return %arg0, %c0_i32, %c0_i32_0, %c0_i32_1 : i32, i32, i32, i32
  }
  func.func @transform_1(%arg0: i32, %arg1: i32) -> (i32, i32) {
    %c0_i32 = arith.constant 0 : i32
    %c0_i32_0 = arith.constant 0 : i32
    %c0_i32_1 = arith.constant 0 : i32
    return %c0_i32, %c0_i32_0 : i32, i32
  }
  func.func @transform_2(%arg0: i32, %arg1: i32) -> (i32, i32) {
    %c0_i32 = arith.constant 0 : i32
    %c0_i32_0 = arith.constant 0 : i32
    %c0_i32_1 = arith.constant 0 : i32
    return %c0_i32, %c0_i32_0 : i32, i32
  }
  func.func @transform_3(%arg0: i32, %arg1: i32) -> (i32, i32, i32, i32) {
    %c0_i32 = arith.constant 0 : i32
    %c0_i32_0 = arith.constant 0 : i32
    %c0_i32_1 = arith.constant 0 : i32
    return %arg0, %arg1, %c0_i32, %c0_i32_0 : i32, i32, i32, i32
  }
}

</mosaic_0001>

<llo_original>
// kernel: tpu_custom_call.1
$region0: #{tpu_custom_call.1}
  #allocation0 [shape = 'u32[]', space=smem, size = 0x4, offset = 0x4, fixed_abs, tag = 'smem constant byte address 0x4 - core index']
  #allocation1 [shape = 'u32[72,128]{1,0:T(1,128)}', space=vmem, size = 0x9000, scoped, tag = 'internal scratch']
  %s0 = inlined_call_operand.vmem [shape: bf16[2,18,18,4], index: 0, kind: input, shape index: {}]
  %s1 = inlined_call_operand.vmem [shape: bf16[36,128], index: 1, kind: input, shape index: {}]
  %s2 = inlined_call_operand.vmem [shape: f32[1,128], index: 2, kind: input, shape index: {}]
  %s3 = inlined_call_operand.vmem [shape: bf16[2,16,16,8], index: 3, kind: output, shape index: {}]
  %s4 = sld [smem:[#allocation0]]
  $region45: #{tpu_custom_call.1} parent=0
    _
  %s6 = ssub.s32 1, %s4
  %s7 = scalar_select 0, %s6, %s4
  loop: start=0, step=1, limit=4
  $region2: #{tpu_custom_call.1} parent=0 // loop_pre_header
    _
  $region3: #{tpu_custom_call.1} parent=0 // loop_header
    %s9 = sphi 0, %s13
    %p10 = scmp.ge.s32.totalorder %s9, 4
    %s16 = sphi 0, %s28
    %s17 = sphi 0, %s24
    %s18 = sphi 0, %s16
    %s19 = sphi 0, %s17
    %s20 = sphi 0, %s18
    %s21 = sphi 0, %s19
    %s31 = sphi 0, %s33
    %s34 = sphi 0, %s31
    %s35 = sphi 0, %s34
    %s51 = sphi 0, %s35
    %s55 = sphi 0, %s55
    %s57 = sphi 0, %s55
    %s58 = sphi 0, %s57
    %s72 = sphi 0, %s58
    %s76 = sphi 0, %s76
    %s78 = sphi 0, %s76
    %s79 = sphi 0, %s78
    %s93 = sphi 0, %s79
    %s101 = sphi 0, %s103
    %s104 = sphi 0, %s101
    %s105 = sphi 0, %s104
    %s121 = sphi 0, %s105
  $region4: #{tpu_custom_call.1} parent=0 // loop_header_branch
    %12 = sbr.rel (%p10) target = $region8
  $region5: #{tpu_custom_call.1} parent=0 // loop_body
    %s14 = ssub.s32 %s9, 1
    %s15 = ssub.s32 %s9, 2
    %s22 = sadd.s32 1, %s17
    %p23 = scmp.ge.s32.totalorder %s22, 1
    %s24 = scalar_select %p23, 0, %s22
    %s25 = sadd.s32 1, %s16
    %s26 = scalar_select %p23, %s25, %s16
    %p27 = scmp.ge.s32.totalorder %s26, 2
    %s28 = scalar_select %p27, 0, %s26
    %s29 = ssub.s32 %s16, %s28
    %p30 = scmp.eq.s32.totalorder %s29, 0
    %s32 = sadd.s32 %s31, 1
    %s33 = scalar_select %p30, %s31, %s32
    %p36 = pneg %p30
    %p37 = scmp.eq.s32.totalorder %s9, 1
    %p38 = por %p36, %p37
    %p39 = scmp.ne.s32.totalorder %s31, %s34
    %p40 = scmp.eq.s32.totalorder %s9, 0
    %p41 = por %p39, %p40
    %p42 = scmp.ne.s32.totalorder %s31, %s34
    %p43 = scmp.eq.s32.totalorder %s14, 1
    %p44 = por %p42, %p43
    %p45 = scmp.ne.s32.totalorder %s34, %s35
    %p46 = scmp.eq.s32.totalorder %s14, 0
    %p47 = por %p45, %p46
    %p48 = scmp.ne.s32.totalorder %s34, %s35
    %p49 = scmp.eq.s32.totalorder %s15, 1
    %p50 = por %p48, %p49
    %p52 = scmp.ne.s32.totalorder %s35, %s51
    %p53 = scmp.eq.s32.totalorder %s15, 0
    %p54 = por %p52, %p53
    %s56 = sadd.s32 %s55, 1
    %p59 = scmp.eq.s32.totalorder %s9, 1
    %p60 = scmp.ne.s32.totalorder %s55, %s57
    %p61 = scmp.eq.s32.totalorder %s9, 0
    %p62 = por %p60, %p61
    %p63 = scmp.ne.s32.totalorder %s55, %s57
    %p64 = scmp.eq.s32.totalorder %s14, 1
    %p65 = por %p63, %p64
    %p66 = scmp.ne.s32.totalorder %s57, %s58
    %p67 = scmp.eq.s32.totalorder %s14, 0
    %p68 = por %p66, %p67
    %p69 = scmp.ne.s32.totalorder %s57, %s58
    %p70 = scmp.eq.s32.totalorder %s15, 1
    %p71 = por %p69, %p70
    %p73 = scmp.ne.s32.totalorder %s58, %s72
    %p74 = scmp.eq.s32.totalorder %s15, 0
    %p75 = por %p73, %p74
    %s77 = sadd.s32 %s76, 1
    %p80 = scmp.eq.s32.totalorder %s9, 1
    %p81 = scmp.ne.s32.totalorder %s76, %s78
    %p82 = scmp.eq.s32.totalorder %s9, 0
    %p83 = por %p81, %p82
    %p84 = scmp.ne.s32.totalorder %s76, %s78
    %p85 = scmp.eq.s32.totalorder %s14, 1
    %p86 = por %p84, %p85
    %p87 = scmp.ne.s32.totalorder %s78, %s79
    %p88 = scmp.eq.s32.totalorder %s14, 0
    %p89 = por %p87, %p88
    %p90 = scmp.ne.s32.totalorder %s78, %s79
    %p91 = scmp.eq.s32.totalorder %s15, 1
    %p92 = por %p90, %p91
    %p94 = scmp.ne.s32.totalorder %s79, %s93
    %p95 = scmp.eq.s32.totalorder %s15, 0
    %p96 = por %p94, %p95
    %s97 = ssub.s32 %s16, %s28
    %s98 = ssub.s32 %s17, %s24
    %s99 = sor.u32 %s97, %s98
    %p100 = scmp.eq.s32.totalorder %s99, 0
    %s102 = sadd.s32 %s101, 1
    %s103 = scalar_select %p100, %s101, %s102
    %p106 = pneg %p100
    %p107 = scmp.eq.s32.totalorder %s9, 1
    %p108 = por %p106, %p107
    %p109 = scmp.ne.s32.totalorder %s101, %s104
    %p110 = scmp.eq.s32.totalorder %s9, 0
    %p111 = por %p109, %p110
    %p112 = scmp.ne.s32.totalorder %s101, %s104
    %p113 = scmp.eq.s32.totalorder %s14, 1
    %p114 = por %p112, %p113
    %p115 = scmp.ne.s32.totalorder %s104, %s105
    %p116 = scmp.eq.s32.totalorder %s14, 0
    %p117 = por %p115, %p116
    %p118 = scmp.ne.s32.totalorder %s104, %s105
    %p119 = scmp.eq.s32.totalorder %s15, 1
    %p120 = por %p118, %p119
    %p122 = scmp.ne.s32.totalorder %s105, %s121
    %p123 = scmp.eq.s32.totalorder %s15, 0
    %p124 = por %p122, %p123
    %p125 = scmp.le.s32.totalorder 1, %s9
    %p126 = scmp.lt.s32.totalorder %s9, 3
    %p127 = pnand %p125, %p126
    %p128 = pneg %p127
    // Predicated region
    $region9: #{tpu_custom_call.1} parent=5 // pred_check
      _
    $region10: #{tpu_custom_call.1} parent=5 // pred_check_branch
      %130 = sbr.rel (%p127) target = $region12
    $region11: #{tpu_custom_call.1} parent=5 // pred_region
      %s131 = ssub.s32 %s9, 1
      // Predicated region
      $region13: #{tpu_custom_call.1} parent=11 // pred_check
        %p132 = pneg %p68
      $region14: #{tpu_custom_call.1} parent=11 // pred_check_branch
        %134 = sbr.rel (%p132) target = $region16
      $region15: #{tpu_custom_call.1} parent=11 // pred_region
        _
      $region16: #{tpu_custom_call.1} parent=11 // pred_fallthru
        _
      // Predicated region
      $region17: #{tpu_custom_call.1} parent=11 // pred_check
        %p135 = pneg %p89
      $region18: #{tpu_custom_call.1} parent=11 // pred_check_branch
        %137 = sbr.rel (%p135) target = $region20
      $region19: #{tpu_custom_call.1} parent=11 // pred_region
        _
      $region20: #{tpu_custom_call.1} parent=11 // pred_fallthru
        _
    $region12: #{tpu_custom_call.1} parent=5 // pred_fallthru
      _
    %p138 = scmp.lt.s32.totalorder %s9, 2
    // Predicated region
    $region21: #{tpu_custom_call.1} parent=5 // pred_check
      %p139 = pneg %p138
    $region22: #{tpu_custom_call.1} parent=5 // pred_check_branch
      %141 = sbr.rel (%p139) target = $region24
    $region23: #{tpu_custom_call.1} parent=5 // pred_region
      // Predicated region
      $region25: #{tpu_custom_call.1} parent=23 // pred_check
        %p142 = pneg %p41
      $region26: #{tpu_custom_call.1} parent=23 // pred_check_branch
        %144 = sbr.rel (%p142) target = $region28
      $region27: #{tpu_custom_call.1} parent=23 // pred_region
        %p145 = scmp.lt.s32.totalorder %s16, 1
        %s146 = scalar_select %p145, %s16, 1
        %s147 = smul.addr %s146, 54
        %s148 = smul.addr %s147, 4
        %s149 = scalar_lea.vmem %s0, %s148
      $region28: #{tpu_custom_call.1} parent=23 // pred_fallthru
        _
    $region24: #{tpu_custom_call.1} parent=5 // pred_fallthru
      _
    %p150 = scmp.le.s32.totalorder 1, %s9
    %p151 = scmp.lt.s32.totalorder %s9, 3
    %p152 = pnand %p150, %p151
    %p153 = pneg %p152
    // Predicated region
    $region29: #{tpu_custom_call.1} parent=5 // pred_check
      _
    $region30: #{tpu_custom_call.1} parent=5 // pred_check_branch
      %155 = sbr.rel (%p152) target = $region32
    $region31: #{tpu_custom_call.1} parent=5 // pred_region
      %s156 = ssub.s32 %s9, 1
      %p157 = scmp.lt.s32.totalorder %s18, 1
      %s158 = scalar_select %p157, %s18, 1
      %s159 = smul.addr %s158, 54
      %s160 = smul.addr %s159, 4
      %s161 = scalar_lea.vmem %s0, %s160
      %p162 = pneg %p47
      %p163 = pneg %p44
      %p164 = pneg %p68
      %p165 = pneg %p65
      %p166 = pneg %p89
      %p167 = pneg %p86
      %p168 = pneg %p117
      %p169 = pneg %p114
      %s170 = smul.u32 16, %s19
      %p171 = scmp.lt.s32.totalorder %s18, 1
      %s172 = scalar_select %p171, %s18, 1
      %p173 = scmp.lt.s32.totalorder %s170, 15
      %s174 = scalar_select %p173, %s170, 15
      %s175 = smul.addr %s174, 2
      %s176 = smul.addr %s172, 32
      %s177 = sadd.s32 %s175, %s176
      %s178 = smul.addr %s177, 4
      %s179 = scalar_lea.vmem %s3, %s178
      %p180 = scmp.lt.s32.totalorder %s18, 1
      %s181 = scalar_select %p180, %s18, 1
      %s182 = smul.addr %s181, 54
      %s183 = smul.addr %s182, 4
      %s184 = scalar_lea.vmem %s0, %s183
      %s185 = smul.u32 16, %s19
      %p186 = scmp.lt.s32.totalorder %s18, 1
      %s187 = scalar_select %p186, %s18, 1
      %p188 = scmp.lt.s32.totalorder %s185, 15
      %s189 = scalar_select %p188, %s185, 15
      %s190 = smul.addr %s189, 2
      %s191 = smul.addr %s187, 32
      %s192 = sadd.s32 %s190, %s191
      %s193 = smul.addr %s192, 4
      %s194 = scalar_lea.vmem %s3, %s193
      %s195 = smul.u32 16, %s19
      %v197 = vld [vmem:[%s184] sm:$0xf]
      %v198 = vld [vmem:[%s184 + $0x4] sm:$0xf]
      %v199 = vld [vmem:[%s184 + $0xc] sm:$0xf]
      %v200 = vld [vmem:[%s184 + $0x10] sm:$0xf]
      %v201 = vld [vmem:[%s184 + $0x18] sm:$0xf]
      %v202 = vld [vmem:[%s184 + $0x1c] sm:$0xf]
      %v203 = vld [vmem:[%s184 + $0x24] sm:$0xf]
      %v204 = vld [vmem:[%s184 + $0x28] sm:$0xf]
      %v205 = vld [vmem:[%s184 + $0x30] sm:$0xf]
      %v206 = vld [vmem:[%s184 + $0x34] sm:$0xf]
      %v207 = vld [vmem:[%s184 + $0x3c] sm:$0xf]
      %v208 = vld [vmem:[%s184 + $0x40] sm:$0xf]
      %v209 = vld [vmem:[%s184 + $0x48] sm:$0xf]
      %v210 = vld [vmem:[%s184 + $0x4c] sm:$0xf]
      %v211 = vld [vmem:[%s184 + $0x54] sm:$0xf]
      %v212 = vld [vmem:[%s184 + $0x58] sm:$0xf]
      %v213 = vld [vmem:[%s184 + $0x60] sm:$0xf]
      %v214 = vld [vmem:[%s184 + $0x64] sm:$0xf]
      %v215 = vld [vmem:[%s184 + $0x6c] sm:$0xf]
      %v216 = vld [vmem:[%s184 + $0x70] sm:$0xf]
      %v217 = vld [vmem:[%s184 + $0x78] sm:$0xf]
      %v218 = vld [vmem:[%s184 + $0x7c] sm:$0xf]
      %v219 = vld [vmem:[%s184 + $0x84] sm:$0xf]
      %v220 = vld [vmem:[%s184 + $0x88] sm:$0xf]
      %v221 = vld [vmem:[%s184 + $0x90] sm:$0xf]
      %v222 = vld [vmem:[%s184 + $0x94] sm:$0xf]
      %v223 = vld [vmem:[%s184 + $0x9c] sm:$0xf]
      %v224 = vld [vmem:[%s184 + $0xa0] sm:$0xf]
      %v225 = vld [vmem:[%s184 + $0xa8] sm:$0xf]
      %v226 = vld [vmem:[%s184 + $0xac] sm:$0xf]
      %v227 = vld [vmem:[%s184 + $0xb4] sm:$0xf]
      %v228 = vld [vmem:[%s184 + $0xb8] sm:$0xf]
      %v229 = vld [vmem:[%s184 + $0x8] sm:$0x1]
      %v230 = vld [vmem:[%s184 + $0x14] sm:$0x1]
      %v231 = vld [vmem:[%s184 + $0x20] sm:$0x1]
      %v232 = vld [vmem:[%s184 + $0x2c] sm:$0x1]
      %v233 = vld [vmem:[%s184 + $0x38] sm:$0x1]
      %v234 = vld [vmem:[%s184 + $0x44] sm:$0x1]
      %v235 = vld [vmem:[%s184 + $0x50] sm:$0x1]
      %v236 = vld [vmem:[%s184 + $0x5c] sm:$0x1]
      %v237 = vld [vmem:[%s184 + $0x68] sm:$0x1]
      %v238 = vld [vmem:[%s184 + $0x74] sm:$0x1]
      %v239 = vld [vmem:[%s184 + $0x80] sm:$0x1]
      %v240 = vld [vmem:[%s184 + $0x8c] sm:$0x1]
      %v241 = vld [vmem:[%s184 + $0x98] sm:$0x1]
      %v242 = vld [vmem:[%s184 + $0xa4] sm:$0x1]
      %v243 = vld [vmem:[%s184 + $0xb0] sm:$0x1]
      %v244 = vld [vmem:[%s184 + $0xbc] sm:$0x1]
      %v245 = vld [vmem:[%s184] sm:$0xe]
      %v246 = vld [vmem:[%s184 + $0xc] sm:$0xe]
      %v247 = vld [vmem:[%s184 + $0x18] sm:$0xe]
      %v248 = vld [vmem:[%s184 + $0x24] sm:$0xe]
      %v249 = vld [vmem:[%s184 + $0x30] sm:$0xe]
      %v250 = vld [vmem:[%s184 + $0x3c] sm:$0xe]
      %v251 = vld [vmem:[%s184 + $0x48] sm:$0xe]
      %v252 = vld [vmem:[%s184 + $0x54] sm:$0xe]
      %v253 = vld [vmem:[%s184 + $0x60] sm:$0xe]
      %v254 = vld [vmem:[%s184 + $0x6c] sm:$0xe]
      %v255 = vld [vmem:[%s184 + $0x78] sm:$0xe]
      %v256 = vld [vmem:[%s184 + $0x84] sm:$0xe]
      %v257 = vld [vmem:[%s184 + $0x90] sm:$0xe]
      %v258 = vld [vmem:[%s184 + $0x9c] sm:$0xe]
      %v259 = vld [vmem:[%s184 + $0xa8] sm:$0xe]
      %v260 = vld [vmem:[%s184 + $0xb4] sm:$0xe]
      %s261 = scalar_lea.vmem %s184, 12
      %v262 = vld [vmem:[%s261] sm:$0xf]
      %v263 = vld [vmem:[%s261 + $0x4] sm:$0xf]
      %v264 = vld [vmem:[%s261 + $0xc] sm:$0xf]
      %v265 = vld [vmem:[%s261 + $0x10] sm:$0xf]
      %v266 = vld [vmem:[%s261 + $0x18] sm:$0xf]
      %v267 = vld [vmem:[%s261 + $0x1c] sm:$0xf]
      %v268 = vld [vmem:[%s261 + $0x24] sm:$0xf]
      %v269 = vld [vmem:[%s261 + $0x28] sm:$0xf]
      %v270 = vld [vmem:[%s261 + $0x30] sm:$0xf]
      %v271 = vld [vmem:[%s261 + $0x34] sm:$0xf]
      %v272 = vld [vmem:[%s261 + $0x3c] sm:$0xf]
      %v273 = vld [vmem:[%s261 + $0x40] sm:$0xf]
      %v274 = vld [vmem:[%s261 + $0x48] sm:$0xf]
      %v275 = vld [vmem:[%s261 + $0x4c] sm:$0xf]
      %v276 = vld [vmem:[%s261 + $0x54] sm:$0xf]
      %v277 = vld [vmem:[%s261 + $0x58] sm:$0xf]
      %v278 = vld [vmem:[%s261 + $0x60] sm:$0xf]
      %v279 = vld [vmem:[%s261 + $0x64] sm:$0xf]
      %v280 = vld [vmem:[%s261 + $0x6c] sm:$0xf]
      %v281 = vld [vmem:[%s261 + $0x70] sm:$0xf]
      %v282 = vld [vmem:[%s261 + $0x78] sm:$0xf]
      %v283 = vld [vmem:[%s261 + $0x7c] sm:$0xf]
      %v284 = vld [vmem:[%s261 + $0x84] sm:$0xf]
      %v285 = vld [vmem:[%s261 + $0x88] sm:$0xf]
      %v286 = vld [vmem:[%s261 + $0x90] sm:$0xf]
      %v287 = vld [vmem:[%s261 + $0x94] sm:$0xf]
      %v288 = vld [vmem:[%s261 + $0x9c] sm:$0xf]
      %v289 = vld [vmem:[%s261 + $0xa0] sm:$0xf]
      %v290 = vld [vmem:[%s261 + $0xa8] sm:$0xf]
      %v291 = vld [vmem:[%s261 + $0xac] sm:$0xf]
      %v292 = vld [vmem:[%s261 + $0xb4] sm:$0xf]
      %v293 = vld [vmem:[%s261 + $0xb8] sm:$0xf]
      %v294 = vld [vmem:[%s261 + $0x8] sm:$0x1]
      %v295 = vld [vmem:[%s261 + $0x14] sm:$0x1]
      %v296 = vld [vmem:[%s261 + $0x20] sm:$0x1]
      %v297 = vld [vmem:[%s261 + $0x2c] sm:$0x1]
      %v298 = vld [vmem:[%s261 + $0x38] sm:$0x1]
      %v299 = vld [vmem:[%s261 + $0x44] sm:$0x1]
      %v300 = vld [vmem:[%s261 + $0x50] sm:$0x1]
      %v301 = vld [vmem:[%s261 + $0x5c] sm:$0x1]
      %v302 = vld [vmem:[%s261 + $0x68] sm:$0x1]
      %v303 = vld [vmem:[%s261 + $0x74] sm:$0x1]
      %v304 = vld [vmem:[%s261 + $0x80] sm:$0x1]
      %v305 = vld [vmem:[%s261 + $0x8c] sm:$0x1]
      %v306 = vld [vmem:[%s261 + $0x98] sm:$0x1]
      %v307 = vld [vmem:[%s261 + $0xa4] sm:$0x1]
      %v308 = vld [vmem:[%s261 + $0xb0] sm:$0x1]
      %v309 = vld [vmem:[%s261 + $0xbc] sm:$0x1]
      %v310 = vld [vmem:[%s261] sm:$0xe]
      %v311 = vld [vmem:[%s261 + $0xc] sm:$0xe]
      %v312 = vld [vmem:[%s261 + $0x18] sm:$0xe]
      %v313 = vld [vmem:[%s261 + $0x24] sm:$0xe]
      %v314 = vld [vmem:[%s261 + $0x30] sm:$0xe]
      %v315 = vld [vmem:[%s261 + $0x3c] sm:$0xe]
      %v316 = vld [vmem:[%s261 + $0x48] sm:$0xe]
      %v317 = vld [vmem:[%s261 + $0x54] sm:$0xe]
      %v318 = vld [vmem:[%s261 + $0x60] sm:$0xe]
      %v319 = vld [vmem:[%s261 + $0x6c] sm:$0xe]
      %v320 = vld [vmem:[%s261 + $0x78] sm:$0xe]
      %v321 = vld [vmem:[%s261 + $0x84] sm:$0xe]
      %v322 = vld [vmem:[%s261 + $0x90] sm:$0xe]
      %v323 = vld [vmem:[%s261 + $0x9c] sm:$0xe]
      %v324 = vld [vmem:[%s261 + $0xa8] sm:$0xe]
      %v325 = vld [vmem:[%s261 + $0xb4] sm:$0xe]
      %s326 = scalar_lea.vmem %s184, 24
      %v327 = vld [vmem:[%s326] sm:$0xf]
      %v328 = vld [vmem:[%s326 + $0x4] sm:$0xf]
      %v329 = vld [vmem:[%s326 + $0xc] sm:$0xf]
      %v330 = vld [vmem:[%s326 + $0x10] sm:$0xf]
      %v331 = vld [vmem:[%s326 + $0x18] sm:$0xf]
      %v332 = vld [vmem:[%s326 + $0x1c] sm:$0xf]
      %v333 = vld [vmem:[%s326 + $0x24] sm:$0xf]
      %v334 = vld [vmem:[%s326 + $0x28] sm:$0xf]
      %v335 = vld [vmem:[%s326 + $0x30] sm:$0xf]
      %v336 = vld [vmem:[%s326 + $0x34] sm:$0xf]
      %v337 = vld [vmem:[%s326 + $0x3c] sm:$0xf]
      %v338 = vld [vmem:[%s326 + $0x40] sm:$0xf]
      %v339 = vld [vmem:[%s326 + $0x48] sm:$0xf]
      %v340 = vld [vmem:[%s326 + $0x4c] sm:$0xf]
      %v341 = vld [vmem:[%s326 + $0x54] sm:$0xf]
      %v342 = vld [vmem:[%s326 + $0x58] sm:$0xf]
      %v343 = vld [vmem:[%s326 + $0x60] sm:$0xf]
      %v344 = vld [vmem:[%s326 + $0x64] sm:$0xf]
      %v345 = vld [vmem:[%s326 + $0x6c] sm:$0xf]
      %v346 = vld [vmem:[%s326 + $0x70] sm:$0xf]
      %v347 = vld [vmem:[%s326 + $0x78] sm:$0xf]
      %v348 = vld [vmem:[%s326 + $0x7c] sm:$0xf]
      %v349 = vld [vmem:[%s326 + $0x84] sm:$0xf]
      %v350 = vld [vmem:[%s326 + $0x88] sm:$0xf]
      %v351 = vld [vmem:[%s326 + $0x90] sm:$0xf]
      %v352 = vld [vmem:[%s326 + $0x94] sm:$0xf]
      %v353 = vld [vmem:[%s326 + $0x9c] sm:$0xf]
      %v354 = vld [vmem:[%s326 + $0xa0] sm:$0xf]
      %v355 = vld [vmem:[%s326 + $0xa8] sm:$0xf]
      %v356 = vld [vmem:[%s326 + $0xac] sm:$0xf]
      %v357 = vld [vmem:[%s326 + $0xb4] sm:$0xf]
      %v358 = vld [vmem:[%s326 + $0xb8] sm:$0xf]
      %v359 = vld [vmem:[%s326 + $0x8] sm:$0x1]
      %v360 = vld [vmem:[%s326 + $0x14] sm:$0x1]
      %v361 = vld [vmem:[%s326 + $0x20] sm:$0x1]
      %v362 = vld [vmem:[%s326 + $0x2c] sm:$0x1]
      %v363 = vld [vmem:[%s326 + $0x38] sm:$0x1]
      %v364 = vld [vmem:[%s326 + $0x44] sm:$0x1]
      %v365 = vld [vmem:[%s326 + $0x50] sm:$0x1]
      %v366 = vld [vmem:[%s326 + $0x5c] sm:$0x1]
      %v367 = vld [vmem:[%s326 + $0x68] sm:$0x1]
      %v368 = vld [vmem:[%s326 + $0x74] sm:$0x1]
      %v369 = vld [vmem:[%s326 + $0x80] sm:$0x1]
      %v370 = vld [vmem:[%s326 + $0x8c] sm:$0x1]
      %v371 = vld [vmem:[%s326 + $0x98] sm:$0x1]
      %v372 = vld [vmem:[%s326 + $0xa4] sm:$0x1]
      %v373 = vld [vmem:[%s326 + $0xb0] sm:$0x1]
      %v374 = vld [vmem:[%s326 + $0xbc] sm:$0x1]
      %v375 = vld [vmem:[%s326] sm:$0xe]
      %v376 = vld [vmem:[%s326 + $0xc] sm:$0xe]
      %v377 = vld [vmem:[%s326 + $0x18] sm:$0xe]
      %v378 = vld [vmem:[%s326 + $0x24] sm:$0xe]
      %v379 = vld [vmem:[%s326 + $0x30] sm:$0xe]
      %v380 = vld [vmem:[%s326 + $0x3c] sm:$0xe]
      %v381 = vld [vmem:[%s326 + $0x48] sm:$0xe]
      %v382 = vld [vmem:[%s326 + $0x54] sm:$0xe]
      %v383 = vld [vmem:[%s326 + $0x60] sm:$0xe]
      %v384 = vld [vmem:[%s326 + $0x6c] sm:$0xe]
      %v385 = vld [vmem:[%s326 + $0x78] sm:$0xe]
      %v386 = vld [vmem:[%s326 + $0x84] sm:$0xe]
      %v387 = vld [vmem:[%s326 + $0x90] sm:$0xe]
      %v388 = vld [vmem:[%s326 + $0x9c] sm:$0xe]
      %v389 = vld [vmem:[%s326 + $0xa8] sm:$0xe]
      %v390 = vld [vmem:[%s326 + $0xb4] sm:$0xe]
      %v423 = vunpack.c.l.b16 %v197
      %v424 = vunpack.c.l.b16 %v198
      %v425 = vunpack.c.l.b16 %v199
      %v426 = vunpack.c.l.b16 %v200
      %v427 = vunpack.c.l.b16 %v201
      %v428 = vunpack.c.l.b16 %v202
      %v429 = vunpack.c.l.b16 %v203
      %v430 = vunpack.c.l.b16 %v204
      %v431 = vunpack.c.l.b16 %v205
      %v432 = vunpack.c.l.b16 %v206
      %v433 = vunpack.c.l.b16 %v207
      %v434 = vunpack.c.l.b16 %v208
      %v435 = vunpack.c.l.b16 %v209
      %v436 = vunpack.c.l.b16 %v210
      %v437 = vunpack.c.l.b16 %v211
      %v438 = vunpack.c.l.b16 %v212
      %v439 = vunpack.c.l.b16 %v213
      %v440 = vunpack.c.l.b16 %v214
      %v441 = vunpack.c.l.b16 %v215
      %v442 = vunpack.c.l.b16 %v216
      %v443 = vunpack.c.l.b16 %v217
      %v444 = vunpack.c.l.b16 %v218
      %v445 = vunpack.c.l.b16 %v219
      %v446 = vunpack.c.l.b16 %v220
      %v447 = vunpack.c.l.b16 %v221
      %v448 = vunpack.c.l.b16 %v222
      %v449 = vunpack.c.l.b16 %v223
      %v450 = vunpack.c.l.b16 %v224
      %v451 = vunpack.c.l.b16 %v225
      %v452 = vunpack.c.l.b16 %v226
      %v453 = vunpack.c.l.b16 %v227
      %v454 = vunpack.c.l.b16 %v228
      %v455 = vpack.c.b16 %v424, %v423
      %v456 = vpack.c.b16 %v426, %v425
      %v457 = vpack.c.b16 %v428, %v427
      %v458 = vpack.c.b16 %v430, %v429
      %v459 = vpack.c.b16 %v432, %v431
      %v460 = vpack.c.b16 %v434, %v433
      %v461 = vpack.c.b16 %v436, %v435
      %v462 = vpack.c.b16 %v438, %v437
      %v463 = vpack.c.b16 %v440, %v439
      %v464 = vpack.c.b16 %v442, %v441
      %v465 = vpack.c.b16 %v444, %v443
      %v466 = vpack.c.b16 %v446, %v445
      %v467 = vpack.c.b16 %v448, %v447
      %v468 = vpack.c.b16 %v450, %v449
      %v469 = vpack.c.b16 %v452, %v451
      %v470 = vpack.c.b16 %v454, %v453
      %v487 = vunpack.c.l.b16 %v229
      %v488 = vunpack.c.l.b16 %v230
      %v489 = vunpack.c.l.b16 %v231
      %v490 = vunpack.c.l.b16 %v232
      %v491 = vunpack.c.l.b16 %v233
      %v492 = vunpack.c.l.b16 %v234
      %v493 = vunpack.c.l.b16 %v235
      %v494 = vunpack.c.l.b16 %v236
      %v495 = vunpack.c.l.b16 %v237
      %v496 = vunpack.c.l.b16 %v238
      %v497 = vunpack.c.l.b16 %v239
      %v498 = vunpack.c.l.b16 %v240
      %v499 = vunpack.c.l.b16 %v241
      %v500 = vunpack.c.l.b16 %v242
      %v501 = vunpack.c.l.b16 %v243
      %v502 = vunpack.c.l.b16 %v244
      %v503 = vpack.c.b16 %v487, %v487
      %v504 = vpack.c.b16 %v488, %v488
      %v505 = vpack.c.b16 %v489, %v489
      %v506 = vpack.c.b16 %v490, %v490
      %v507 = vpack.c.b16 %v491, %v491
      %v508 = vpack.c.b16 %v492, %v492
      %v509 = vpack.c.b16 %v493, %v493
      %v510 = vpack.c.b16 %v494, %v494
      %v511 = vpack.c.b16 %v495, %v495
      %v512 = vpack.c.b16 %v496, %v496
      %v513 = vpack.c.b16 %v497, %v497
      %v514 = vpack.c.b16 %v498, %v498
      %v515 = vpack.c.b16 %v499, %v499
      %v516 = vpack.c.b16 %v500, %v500
      %v517 = vpack.c.b16 %v501, %v501
      %v518 = vpack.c.b16 %v502, %v502
      %vm519 = vsmask.f32 7424
      %v521 = vshrl.u32 %v455, 16
      %v523 = vshll.u32 %v455, 16
      %v525 = vrot.slane %v523, 1
      %v526 = vor.u32 %v521, %v525
      %v528 = vshll.u32 %v503, 16
      %v530 = vrot.slane %v528, 1
      %v531 = vsel %vm519, %v526, %v530
      %v533 = vshrl.u32 %v456, 16
      %v535 = vshll.u32 %v456, 16
      %v537 = vrot.slane %v535, 1
      %v538 = vor.u32 %v533, %v537
      %v540 = vshll.u32 %v504, 16
      %v542 = vrot.slane %v540, 1
      %v543 = vsel %vm519, %v538, %v542
      %v545 = vshrl.u32 %v457, 16
      %v547 = vshll.u32 %v457, 16
      %v549 = vrot.slane %v547, 1
      %v550 = vor.u32 %v545, %v549
      %v552 = vshll.u32 %v505, 16
      %v554 = vrot.slane %v552, 1
      %v555 = vsel %vm519, %v550, %v554
      %v557 = vshrl.u32 %v458, 16
      %v559 = vshll.u32 %v458, 16
      %v561 = vrot.slane %v559, 1
      %v562 = vor.u32 %v557, %v561
      %v564 = vshll.u32 %v506, 16
      %v566 = vrot.slane %v564, 1
      %v567 = vsel %vm519, %v562, %v566
      %v569 = vshrl.u32 %v459, 16
      %v571 = vshll.u32 %v459, 16
      %v573 = vrot.slane %v571, 1
      %v574 = vor.u32 %v569, %v573
      %v576 = vshll.u32 %v507, 16
      %v578 = vrot.slane %v576, 1
      %v579 = vsel %vm519, %v574, %v578
      %v581 = vshrl.u32 %v460, 16
      %v583 = vshll.u32 %v460, 16
      %v585 = vrot.slane %v583, 1
      %v586 = vor.u32 %v581, %v585
      %v588 = vshll.u32 %v508, 16
      %v590 = vrot.slane %v588, 1
      %v591 = vsel %vm519, %v586, %v590
      %v593 = vshrl.u32 %v461, 16
      %v595 = vshll.u32 %v461, 16
      %v597 = vrot.slane %v595, 1
      %v598 = vor.u32 %v593, %v597
      %v600 = vshll.u32 %v509, 16
      %v602 = vrot.slane %v600, 1
      %v603 = vsel %vm519, %v598, %v602
      %v605 = vshrl.u32 %v462, 16
      %v607 = vshll.u32 %v462, 16
      %v609 = vrot.slane %v607, 1
      %v610 = vor.u32 %v605, %v609
      %v612 = vshll.u32 %v510, 16
      %v614 = vrot.slane %v612, 1
      %v615 = vsel %vm519, %v610, %v614
      %v617 = vshrl.u32 %v463, 16
      %v619 = vshll.u32 %v463, 16
      %v621 = vrot.slane %v619, 1
      %v622 = vor.u32 %v617, %v621
      %v624 = vshll.u32 %v511, 16
      %v626 = vrot.slane %v624, 1
      %v627 = vsel %vm519, %v622, %v626
      %v629 = vshrl.u32 %v464, 16
      %v631 = vshll.u32 %v464, 16
      %v633 = vrot.slane %v631, 1
      %v634 = vor.u32 %v629, %v633
      %v636 = vshll.u32 %v512, 16
      %v638 = vrot.slane %v636, 1
      %v639 = vsel %vm519, %v634, %v638
      %v641 = vshrl.u32 %v465, 16
      %v643 = vshll.u32 %v465, 16
      %v645 = vrot.slane %v643, 1
      %v646 = vor.u32 %v641, %v645
      %v648 = vshll.u32 %v513, 16
      %v650 = vrot.slane %v648, 1
      %v651 = vsel %vm519, %v646, %v650
      %v653 = vshrl.u32 %v466, 16
      %v655 = vshll.u32 %v466, 16
      %v657 = vrot.slane %v655, 1
      %v658 = vor.u32 %v653, %v657
      %v660 = vshll.u32 %v514, 16
      %v662 = vrot.slane %v660, 1
      %v663 = vsel %vm519, %v658, %v662
      %v665 = vshrl.u32 %v467, 16
      %v667 = vshll.u32 %v467, 16
      %v669 = vrot.slane %v667, 1
      %v670 = vor.u32 %v665, %v669
      %v672 = vshll.u32 %v515, 16
      %v674 = vrot.slane %v672, 1
      %v675 = vsel %vm519, %v670, %v674
      %v677 = vshrl.u32 %v468, 16
      %v679 = vshll.u32 %v468, 16
      %v681 = vrot.slane %v679, 1
      %v682 = vor.u32 %v677, %v681
      %v684 = vshll.u32 %v516, 16
      %v686 = vrot.slane %v684, 1
      %v687 = vsel %vm519, %v682, %v686
      %v689 = vshrl.u32 %v469, 16
      %v691 = vshll.u32 %v469, 16
      %v693 = vrot.slane %v691, 1
      %v694 = vor.u32 %v689, %v693
      %v696 = vshll.u32 %v517, 16
      %v698 = vrot.slane %v696, 1
      %v699 = vsel %vm519, %v694, %v698
      %v701 = vshrl.u32 %v470, 16
      %v703 = vshll.u32 %v470, 16
      %v705 = vrot.slane %v703, 1
      %v706 = vor.u32 %v701, %v705
      %v708 = vshll.u32 %v518, 16
      %v710 = vrot.slane %v708, 1
      %v711 = vsel %vm519, %v706, %v710
      %712 = vrot.lane.b32.xlu0 %v531, 4
      %v713 = vpop.permute.xlu0 %712
      %714 = vrot.lane.b32.xlu0 %v543, 4
      %v715 = vpop.permute.xlu0 %714
      %716 = vrot.lane.b32.xlu0 %v555, 4
      %v717 = vpop.permute.xlu0 %716
      %718 = vrot.lane.b32.xlu0 %v567, 4
      %v719 = vpop.permute.xlu0 %718
      %720 = vrot.lane.b32.xlu0 %v579, 4
      %v721 = vpop.permute.xlu0 %720
      %722 = vrot.lane.b32.xlu0 %v591, 4
      %v723 = vpop.permute.xlu0 %722
      %724 = vrot.lane.b32.xlu0 %v603, 4
      %v725 = vpop.permute.xlu0 %724
      %726 = vrot.lane.b32.xlu0 %v615, 4
      %v727 = vpop.permute.xlu0 %726
      %728 = vrot.lane.b32.xlu0 %v627, 4
      %v729 = vpop.permute.xlu0 %728
      %730 = vrot.lane.b32.xlu0 %v639, 4
      %v731 = vpop.permute.xlu0 %730
      %732 = vrot.lane.b32.xlu0 %v651, 4
      %v733 = vpop.permute.xlu0 %732
      %734 = vrot.lane.b32.xlu0 %v663, 4
      %v735 = vpop.permute.xlu0 %734
      %736 = vrot.lane.b32.xlu0 %v675, 4
      %v737 = vpop.permute.xlu0 %736
      %738 = vrot.lane.b32.xlu0 %v687, 4
      %v739 = vpop.permute.xlu0 %738
      %740 = vrot.lane.b32.xlu0 %v699, 4
      %v741 = vpop.permute.xlu0 %740
      %742 = vrot.lane.b32.xlu0 %v711, 4
      %v743 = vpop.permute.xlu0 %742
      %v760 = vunpack.c.l.b16 %v245
      %v761 = vunpack.c.l.b16 %v246
      %v762 = vunpack.c.l.b16 %v247
      %v763 = vunpack.c.l.b16 %v248
      %v764 = vunpack.c.l.b16 %v249
      %v765 = vunpack.c.l.b16 %v250
      %v766 = vunpack.c.l.b16 %v251
      %v767 = vunpack.c.l.b16 %v252
      %v768 = vunpack.c.l.b16 %v253
      %v769 = vunpack.c.l.b16 %v254
      %v770 = vunpack.c.l.b16 %v255
      %v771 = vunpack.c.l.b16 %v256
      %v772 = vunpack.c.l.b16 %v257
      %v773 = vunpack.c.l.b16 %v258
      %v774 = vunpack.c.l.b16 %v259
      %v775 = vunpack.c.l.b16 %v260
      %v776 = vpack.c.b16 %v424, %v760
      %v777 = vpack.c.b16 %v426, %v761
      %v778 = vpack.c.b16 %v428, %v762
      %v779 = vpack.c.b16 %v430, %v763
      %v780 = vpack.c.b16 %v432, %v764
      %v781 = vpack.c.b16 %v434, %v765
      %v782 = vpack.c.b16 %v436, %v766
      %v783 = vpack.c.b16 %v438, %v767
      %v784 = vpack.c.b16 %v440, %v768
      %v785 = vpack.c.b16 %v442, %v769
      %v786 = vpack.c.b16 %v444, %v770
      %v787 = vpack.c.b16 %v446, %v771
      %v788 = vpack.c.b16 %v448, %v772
      %v789 = vpack.c.b16 %v450, %v773
      %v790 = vpack.c.b16 %v452, %v774
      %v791 = vpack.c.b16 %v454, %v775
      %vm792 = vcmask 1046528
      %v793 = vrot.slane %v776, 1
      %v794 = vrot.slane %v503, 1
      %v795 = vsel %vm792, %v793, %v794
      %v796 = vrot.slane %v777, 1
      %v797 = vrot.slane %v504, 1
      %v798 = vsel %vm792, %v796, %v797
      %v799 = vrot.slane %v778, 1
      %v800 = vrot.slane %v505, 1
      %v801 = vsel %vm792, %v799, %v800
      %v802 = vrot.slane %v779, 1
      %v803 = vrot.slane %v506, 1
      %v804 = vsel %vm792, %v802, %v803
      %v805 = vrot.slane %v780, 1
      %v806 = vrot.slane %v507, 1
      %v807 = vsel %vm792, %v805, %v806
      %v808 = vrot.slane %v781, 1
      %v809 = vrot.slane %v508, 1
      %v810 = vsel %vm792, %v808, %v809
      %v811 = vrot.slane %v782, 1
      %v812 = vrot.slane %v509, 1
      %v813 = vsel %vm792, %v811, %v812
      %v814 = vrot.slane %v783, 1
      %v815 = vrot.slane %v510, 1
      %v816 = vsel %vm792, %v814, %v815
      %v817 = vrot.slane %v784, 1
      %v818 = vrot.slane %v511, 1
      %v819 = vsel %vm792, %v817, %v818
      %v820 = vrot.slane %v785, 1
      %v821 = vrot.slane %v512, 1
      %v822 = vsel %vm792, %v820, %v821
      %v823 = vrot.slane %v786, 1
      %v824 = vrot.slane %v513, 1
      %v825 = vsel %vm792, %v823, %v824
      %v826 = vrot.slane %v787, 1
      %v827 = vrot.slane %v514, 1
      %v828 = vsel %vm792, %v826, %v827
      %v829 = vrot.slane %v788, 1
      %v830 = vrot.slane %v515, 1
      %v831 = vsel %vm792, %v829, %v830
      %v832 = vrot.slane %v789, 1
      %v833 = vrot.slane %v516, 1
      %v834 = vsel %vm792, %v832, %v833
      %v835 = vrot.slane %v790, 1
      %v836 = vrot.slane %v517, 1
      %v837 = vsel %vm792, %v835, %v836
      %v838 = vrot.slane %v791, 1
      %v839 = vrot.slane %v518, 1
      %v840 = vsel %vm792, %v838, %v839
      %841 = vrot.lane.b32.xlu0 %v795, 8
      %v842 = vpop.permute.xlu0 %841
      %843 = vrot.lane.b32.xlu0 %v798, 8
      %v844 = vpop.permute.xlu0 %843
      %845 = vrot.lane.b32.xlu0 %v801, 8
      %v846 = vpop.permute.xlu0 %845
      %847 = vrot.lane.b32.xlu0 %v804, 8
      %v848 = vpop.permute.xlu0 %847
      %849 = vrot.lane.b32.xlu0 %v807, 8
      %v850 = vpop.permute.xlu0 %849
      %851 = vrot.lane.b32.xlu0 %v810, 8
      %v852 = vpop.permute.xlu0 %851
      %853 = vrot.lane.b32.xlu0 %v813, 8
      %v854 = vpop.permute.xlu0 %853
      %855 = vrot.lane.b32.xlu0 %v816, 8
      %v856 = vpop.permute.xlu0 %855
      %857 = vrot.lane.b32.xlu0 %v819, 8
      %v858 = vpop.permute.xlu0 %857
      %859 = vrot.lane.b32.xlu0 %v822, 8
      %v860 = vpop.permute.xlu0 %859
      %861 = vrot.lane.b32.xlu0 %v825, 8
      %v862 = vpop.permute.xlu0 %861
      %863 = vrot.lane.b32.xlu0 %v828, 8
      %v864 = vpop.permute.xlu0 %863
      %865 = vrot.lane.b32.xlu0 %v831, 8
      %v866 = vpop.permute.xlu0 %865
      %867 = vrot.lane.b32.xlu0 %v834, 8
      %v868 = vpop.permute.xlu0 %867
      %869 = vrot.lane.b32.xlu0 %v837, 8
      %v870 = vpop.permute.xlu0 %869
      %871 = vrot.lane.b32.xlu0 %v840, 8
      %v872 = vpop.permute.xlu0 %871
      %v905 = vunpack.c.l.b16 %v262
      %v906 = vunpack.c.l.b16 %v263
      %v907 = vunpack.c.l.b16 %v264
      %v908 = vunpack.c.l.b16 %v265
      %v909 = vunpack.c.l.b16 %v266
      %v910 = vunpack.c.l.b16 %v267
      %v911 = vunpack.c.l.b16 %v268
      %v912 = vunpack.c.l.b16 %v269
      %v913 = vunpack.c.l.b16 %v270
      %v914 = vunpack.c.l.b16 %v271
      %v915 = vunpack.c.l.b16 %v272
      %v916 = vunpack.c.l.b16 %v273
      %v917 = vunpack.c.l.b16 %v274
      %v918 = vunpack.c.l.b16 %v275
      %v919 = vunpack.c.l.b16 %v276
      %v920 = vunpack.c.l.b16 %v277
      %v921 = vunpack.c.l.b16 %v278
      %v922 = vunpack.c.l.b16 %v279
      %v923 = vunpack.c.l.b16 %v280
      %v924 = vunpack.c.l.b16 %v281
      %v925 = vunpack.c.l.b16 %v282
      %v926 = vunpack.c.l.b16 %v283
      %v927 = vunpack.c.l.b16 %v284
      %v928 = vunpack.c.l.b16 %v285
      %v929 = vunpack.c.l.b16 %v286
      %v930 = vunpack.c.l.b16 %v287
      %v931 = vunpack.c.l.b16 %v288
      %v932 = vunpack.c.l.b16 %v289
      %v933 = vunpack.c.l.b16 %v290
      %v934 = vunpack.c.l.b16 %v291
      %v935 = vunpack.c.l.b16 %v292
      %v936 = vunpack.c.l.b16 %v293
      %v937 = vpack.c.b16 %v906, %v905
      %v938 = vpack.c.b16 %v908, %v907
      %v939 = vpack.c.b16 %v910, %v909
      %v940 = vpack.c.b16 %v912, %v911
      %v941 = vpack.c.b16 %v914, %v913
      %v942 = vpack.c.b16 %v916, %v915
      %v943 = vpack.c.b16 %v918, %v917
      %v944 = vpack.c.b16 %v920, %v919
      %v945 = vpack.c.b16 %v922, %v921
      %v946 = vpack.c.b16 %v924, %v923
      %v947 = vpack.c.b16 %v926, %v925
      %v948 = vpack.c.b16 %v928, %v927
      %v949 = vpack.c.b16 %v930, %v929
      %v950 = vpack.c.b16 %v932, %v931
      %v951 = vpack.c.b16 %v934, %v933
      %v952 = vpack.c.b16 %v936, %v935
      %953 = vrot.lane.b32.xlu0 %v937, 12
      %v954 = vpop.permute.xlu0 %953
      %955 = vrot.lane.b32.xlu0 %v938, 12
      %v956 = vpop.permute.xlu0 %955
      %957 = vrot.lane.b32.xlu0 %v939, 12
      %v958 = vpop.permute.xlu0 %957
      %959 = vrot.lane.b32.xlu0 %v940, 12
      %v960 = vpop.permute.xlu0 %959
      %961 = vrot.lane.b32.xlu0 %v941, 12
      %v962 = vpop.permute.xlu0 %961
      %963 = vrot.lane.b32.xlu0 %v942, 12
      %v964 = vpop.permute.xlu0 %963
      %965 = vrot.lane.b32.xlu0 %v943, 12
      %v966 = vpop.permute.xlu0 %965
      %967 = vrot.lane.b32.xlu0 %v944, 12
      %v968 = vpop.permute.xlu0 %967
      %969 = vrot.lane.b32.xlu0 %v945, 12
      %v970 = vpop.permute.xlu0 %969
      %971 = vrot.lane.b32.xlu0 %v946, 12
      %v972 = vpop.permute.xlu0 %971
      %973 = vrot.lane.b32.xlu0 %v947, 12
      %v974 = vpop.permute.xlu0 %973
      %975 = vrot.lane.b32.xlu0 %v948, 12
      %v976 = vpop.permute.xlu0 %975
      %977 = vrot.lane.b32.xlu0 %v949, 12
      %v978 = vpop.permute.xlu0 %977
      %979 = vrot.lane.b32.xlu0 %v950, 12
      %v980 = vpop.permute.xlu0 %979
      %981 = vrot.lane.b32.xlu0 %v951, 12
      %v982 = vpop.permute.xlu0 %981
      %983 = vrot.lane.b32.xlu0 %v952, 12
      %v984 = vpop.permute.xlu0 %983
      %v1001 = vunpack.c.l.b16 %v294
      %v1002 = vunpack.c.l.b16 %v295
      %v1003 = vunpack.c.l.b16 %v296
      %v1004 = vunpack.c.l.b16 %v297
      %v1005 = vunpack.c.l.b16 %v298
      %v1006 = vunpack.c.l.b16 %v299
      %v1007 = vunpack.c.l.b16 %v300
      %v1008 = vunpack.c.l.b16 %v301
      %v1009 = vunpack.c.l.b16 %v302
      %v1010 = vunpack.c.l.b16 %v303
      %v1011 = vunpack.c.l.b16 %v304
      %v1012 = vunpack.c.l.b16 %v305
      %v1013 = vunpack.c.l.b16 %v306
      %v1014 = vunpack.c.l.b16 %v307
      %v1015 = vunpack.c.l.b16 %v308
      %v1016 = vunpack.c.l.b16 %v309
      %v1017 = vpack.c.b16 %v1001, %v1001
      %v1018 = vpack.c.b16 %v1002, %v1002
      %v1019 = vpack.c.b16 %v1003, %v1003
      %v1020 = vpack.c.b16 %v1004, %v1004
      %v1021 = vpack.c.b16 %v1005, %v1005
      %v1022 = vpack.c.b16 %v1006, %v1006
      %v1023 = vpack.c.b16 %v1007, %v1007
      %v1024 = vpack.c.b16 %v1008, %v1008
      %v1025 = vpack.c.b16 %v1009, %v1009
      %v1026 = vpack.c.b16 %v1010, %v1010
      %v1027 = vpack.c.b16 %v1011, %v1011
      %v1028 = vpack.c.b16 %v1012, %v1012
      %v1029 = vpack.c.b16 %v1013, %v1013
      %v1030 = vpack.c.b16 %v1014, %v1014
      %v1031 = vpack.c.b16 %v1015, %v1015
      %v1032 = vpack.c.b16 %v1016, %v1016
      %v1034 = vshrl.u32 %v937, 16
      %v1036 = vshll.u32 %v937, 16
      %v1038 = vrot.slane %v1036, 1
      %v1039 = vor.u32 %v1034, %v1038
      %v1041 = vshll.u32 %v1017, 16
      %v1043 = vrot.slane %v1041, 1
      %v1044 = vsel %vm519, %v1039, %v1043
      %v1046 = vshrl.u32 %v938, 16
      %v1048 = vshll.u32 %v938, 16
      %v1050 = vrot.slane %v1048, 1
      %v1051 = vor.u32 %v1046, %v1050
      %v1053 = vshll.u32 %v1018, 16
      %v1055 = vrot.slane %v1053, 1
      %v1056 = vsel %vm519, %v1051, %v1055
      %v1058 = vshrl.u32 %v939, 16
      %v1060 = vshll.u32 %v939, 16
      %v1062 = vrot.slane %v1060, 1
      %v1063 = vor.u32 %v1058, %v1062
      %v1065 = vshll.u32 %v1019, 16
      %v1067 = vrot.slane %v1065, 1
      %v1068 = vsel %vm519, %v1063, %v1067
      %v1070 = vshrl.u32 %v940, 16
      %v1072 = vshll.u32 %v940, 16
      %v1074 = vrot.slane %v1072, 1
      %v1075 = vor.u32 %v1070, %v1074
      %v1077 = vshll.u32 %v1020, 16
      %v1079 = vrot.slane %v1077, 1
      %v1080 = vsel %vm519, %v1075, %v1079
      %v1082 = vshrl.u32 %v941, 16
      %v1084 = vshll.u32 %v941, 16
      %v1086 = vrot.slane %v1084, 1
      %v1087 = vor.u32 %v1082, %v1086
      %v1089 = vshll.u32 %v1021, 16
      %v1091 = vrot.slane %v1089, 1
      %v1092 = vsel %vm519, %v1087, %v1091
      %v1094 = vshrl.u32 %v942, 16
      %v1096 = vshll.u32 %v942, 16
      %v1098 = vrot.slane %v1096, 1
      %v1099 = vor.u32 %v1094, %v1098
      %v1101 = vshll.u32 %v1022, 16
      %v1103 = vrot.slane %v1101, 1
      %v1104 = vsel %vm519, %v1099, %v1103
      %v1106 = vshrl.u32 %v943, 16
      %v1108 = vshll.u32 %v943, 16
      %v1110 = vrot.slane %v1108, 1
      %v1111 = vor.u32 %v1106, %v1110
      %v1113 = vshll.u32 %v1023, 16
      %v1115 = vrot.slane %v1113, 1
      %v1116 = vsel %vm519, %v1111, %v1115
      %v1118 = vshrl.u32 %v944, 16
      %v1120 = vshll.u32 %v944, 16
      %v1122 = vrot.slane %v1120, 1
      %v1123 = vor.u32 %v1118, %v1122
      %v1125 = vshll.u32 %v1024, 16
      %v1127 = vrot.slane %v1125, 1
      %v1128 = vsel %vm519, %v1123, %v1127
      %v1130 = vshrl.u32 %v945, 16
      %v1132 = vshll.u32 %v945, 16
      %v1134 = vrot.slane %v1132, 1
      %v1135 = vor.u32 %v1130, %v1134
      %v1137 = vshll.u32 %v1025, 16
      %v1139 = vrot.slane %v1137, 1
      %v1140 = vsel %vm519, %v1135, %v1139
      %v1142 = vshrl.u32 %v946, 16
      %v1144 = vshll.u32 %v946, 16
      %v1146 = vrot.slane %v1144, 1
      %v1147 = vor.u32 %v1142, %v1146
      %v1149 = vshll.u32 %v1026, 16
      %v1151 = vrot.slane %v1149, 1
      %v1152 = vsel %vm519, %v1147, %v1151
      %v1154 = vshrl.u32 %v947, 16
      %v1156 = vshll.u32 %v947, 16
      %v1158 = vrot.slane %v1156, 1
      %v1159 = vor.u32 %v1154, %v1158
      %v1161 = vshll.u32 %v1027, 16
      %v1163 = vrot.slane %v1161, 1
      %v1164 = vsel %vm519, %v1159, %v1163
      %v1166 = vshrl.u32 %v948, 16
      %v1168 = vshll.u32 %v948, 16
      %v1170 = vrot.slane %v1168, 1
      %v1171 = vor.u32 %v1166, %v1170
      %v1173 = vshll.u32 %v1028, 16
      %v1175 = vrot.slane %v1173, 1
      %v1176 = vsel %vm519, %v1171, %v1175
      %v1178 = vshrl.u32 %v949, 16
      %v1180 = vshll.u32 %v949, 16
      %v1182 = vrot.slane %v1180, 1
      %v1183 = vor.u32 %v1178, %v1182
      %v1185 = vshll.u32 %v1029, 16
      %v1187 = vrot.slane %v1185, 1
      %v1188 = vsel %vm519, %v1183, %v1187
      %v1190 = vshrl.u32 %v950, 16
      %v1192 = vshll.u32 %v950, 16
      %v1194 = vrot.slane %v1192, 1
      %v1195 = vor.u32 %v1190, %v1194
      %v1197 = vshll.u32 %v1030, 16
      %v1199 = vrot.slane %v1197, 1
      %v1200 = vsel %vm519, %v1195, %v1199
      %v1202 = vshrl.u32 %v951, 16
      %v1204 = vshll.u32 %v951, 16
      %v1206 = vrot.slane %v1204, 1
      %v1207 = vor.u32 %v1202, %v1206
      %v1209 = vshll.u32 %v1031, 16
      %v1211 = vrot.slane %v1209, 1
      %v1212 = vsel %vm519, %v1207, %v1211
      %v1214 = vshrl.u32 %v952, 16
      %v1216 = vshll.u32 %v952, 16
      %v1218 = vrot.slane %v1216, 1
      %v1219 = vor.u32 %v1214, %v1218
      %v1221 = vshll.u32 %v1032, 16
      %v1223 = vrot.slane %v1221, 1
      %v1224 = vsel %vm519, %v1219, %v1223
      %1225 = vrot.lane.b32.xlu0 %v1044, 16
      %v1226 = vpop.permute.xlu0 %1225
      %1227 = vrot.lane.b32.xlu0 %v1056, 16
      %v1228 = vpop.permute.xlu0 %1227
      %1229 = vrot.lane.b32.xlu0 %v1068, 16
      %v1230 = vpop.permute.xlu0 %1229
      %1231 = vrot.lane.b32.xlu0 %v1080, 16
      %v1232 = vpop.permute.xlu0 %1231
      %1233 = vrot.lane.b32.xlu0 %v1092, 16
      %v1234 = vpop.permute.xlu0 %1233
      %1235 = vrot.lane.b32.xlu0 %v1104, 16
      %v1236 = vpop.permute.xlu0 %1235
      %1237 = vrot.lane.b32.xlu0 %v1116, 16
      %v1238 = vpop.permute.xlu0 %1237
      %1239 = vrot.lane.b32.xlu0 %v1128, 16
      %v1240 = vpop.permute.xlu0 %1239
      %1241 = vrot.lane.b32.xlu0 %v1140, 16
      %v1242 = vpop.permute.xlu0 %1241
      %1243 = vrot.lane.b32.xlu0 %v1152, 16
      %v1244 = vpop.permute.xlu0 %1243
      %1245 = vrot.lane.b32.xlu0 %v1164, 16
      %v1246 = vpop.permute.xlu0 %1245
      %1247 = vrot.lane.b32.xlu0 %v1176, 16
      %v1248 = vpop.permute.xlu0 %1247
      %1249 = vrot.lane.b32.xlu0 %v1188, 16
      %v1250 = vpop.permute.xlu0 %1249
      %1251 = vrot.lane.b32.xlu0 %v1200, 16
      %v1252 = vpop.permute.xlu0 %1251
      %1253 = vrot.lane.b32.xlu0 %v1212, 16
      %v1254 = vpop.permute.xlu0 %1253
      %1255 = vrot.lane.b32.xlu0 %v1224, 16
      %v1256 = vpop.permute.xlu0 %1255
      %v1273 = vunpack.c.l.b16 %v310
      %v1274 = vunpack.c.l.b16 %v311
      %v1275 = vunpack.c.l.b16 %v312
      %v1276 = vunpack.c.l.b16 %v313
      %v1277 = vunpack.c.l.b16 %v314
      %v1278 = vunpack.c.l.b16 %v315
      %v1279 = vunpack.c.l.b16 %v316
      %v1280 = vunpack.c.l.b16 %v317
      %v1281 = vunpack.c.l.b16 %v318
      %v1282 = vunpack.c.l.b16 %v319
      %v1283 = vunpack.c.l.b16 %v320
      %v1284 = vunpack.c.l.b16 %v321
      %v1285 = vunpack.c.l.b16 %v322
      %v1286 = vunpack.c.l.b16 %v323
      %v1287 = vunpack.c.l.b16 %v324
      %v1288 = vunpack.c.l.b16 %v325
      %v1289 = vpack.c.b16 %v906, %v1273
      %v1290 = vpack.c.b16 %v908, %v1274
      %v1291 = vpack.c.b16 %v910, %v1275
      %v1292 = vpack.c.b16 %v912, %v1276
      %v1293 = vpack.c.b16 %v914, %v1277
      %v1294 = vpack.c.b16 %v916, %v1278
      %v1295 = vpack.c.b16 %v918, %v1279
      %v1296 = vpack.c.b16 %v920, %v1280
      %v1297 = vpack.c.b16 %v922, %v1281
      %v1298 = vpack.c.b16 %v924, %v1282
      %v1299 = vpack.c.b16 %v926, %v1283
      %v1300 = vpack.c.b16 %v928, %v1284
      %v1301 = vpack.c.b16 %v930, %v1285
      %v1302 = vpack.c.b16 %v932, %v1286
      %v1303 = vpack.c.b16 %v934, %v1287
      %v1304 = vpack.c.b16 %v936, %v1288
      %v1305 = vrot.slane %v1289, 1
      %v1306 = vrot.slane %v1017, 1
      %v1307 = vsel %vm792, %v1305, %v1306
      %v1308 = vrot.slane %v1290, 1
      %v1309 = vrot.slane %v1018, 1
      %v1310 = vsel %vm792, %v1308, %v1309
      %v1311 = vrot.slane %v1291, 1
      %v1312 = vrot.slane %v1019, 1
      %v1313 = vsel %vm792, %v1311, %v1312
      %v1314 = vrot.slane %v1292, 1
      %v1315 = vrot.slane %v1020, 1
      %v1316 = vsel %vm792, %v1314, %v1315
      %v1317 = vrot.slane %v1293, 1
      %v1318 = vrot.slane %v1021, 1
      %v1319 = vsel %vm792, %v1317, %v1318
      %v1320 = vrot.slane %v1294, 1
      %v1321 = vrot.slane %v1022, 1
      %v1322 = vsel %vm792, %v1320, %v1321
      %v1323 = vrot.slane %v1295, 1
      %v1324 = vrot.slane %v1023, 1
      %v1325 = vsel %vm792, %v1323, %v1324
      %v1326 = vrot.slane %v1296, 1
      %v1327 = vrot.slane %v1024, 1
      %v1328 = vsel %vm792, %v1326, %v1327
      %v1329 = vrot.slane %v1297, 1
      %v1330 = vrot.slane %v1025, 1
      %v1331 = vsel %vm792, %v1329, %v1330
      %v1332 = vrot.slane %v1298, 1
      %v1333 = vrot.slane %v1026, 1
      %v1334 = vsel %vm792, %v1332, %v1333
      %v1335 = vrot.slane %v1299, 1
      %v1336 = vrot.slane %v1027, 1
      %v1337 = vsel %vm792, %v1335, %v1336
      %v1338 = vrot.slane %v1300, 1
      %v1339 = vrot.slane %v1028, 1
      %v1340 = vsel %vm792, %v1338, %v1339
      %v1341 = vrot.slane %v1301, 1
      %v1342 = vrot.slane %v1029, 1
      %v1343 = vsel %vm792, %v1341, %v1342
      %v1344 = vrot.slane %v1302, 1
      %v1345 = vrot.slane %v1030, 1
      %v1346 = vsel %vm792, %v1344, %v1345
      %v1347 = vrot.slane %v1303, 1
      %v1348 = vrot.slane %v1031, 1
      %v1349 = vsel %vm792, %v1347, %v1348
      %v1350 = vrot.slane %v1304, 1
      %v1351 = vrot.slane %v1032, 1
      %v1352 = vsel %vm792, %v1350, %v1351
      %1353 = vrot.lane.b32.xlu0 %v1307, 20
      %v1354 = vpop.permute.xlu0 %1353
      %1355 = vrot.lane.b32.xlu0 %v1310, 20
      %v1356 = vpop.permute.xlu0 %1355
      %1357 = vrot.lane.b32.xlu0 %v1313, 20
      %v1358 = vpop.permute.xlu0 %1357
      %1359 = vrot.lane.b32.xlu0 %v1316, 20
      %v1360 = vpop.permute.xlu0 %1359
      %1361 = vrot.lane.b32.xlu0 %v1319, 20
      %v1362 = vpop.permute.xlu0 %1361
      %1363 = vrot.lane.b32.xlu0 %v1322, 20
      %v1364 = vpop.permute.xlu0 %1363
      %1365 = vrot.lane.b32.xlu0 %v1325, 20
      %v1366 = vpop.permute.xlu0 %1365
      %1367 = vrot.lane.b32.xlu0 %v1328, 20
      %v1368 = vpop.permute.xlu0 %1367
      %1369 = vrot.lane.b32.xlu0 %v1331, 20
      %v1370 = vpop.permute.xlu0 %1369
      %1371 = vrot.lane.b32.xlu0 %v1334, 20
      %v1372 = vpop.permute.xlu0 %1371
      %1373 = vrot.lane.b32.xlu0 %v1337, 20
      %v1374 = vpop.permute.xlu0 %1373
      %1375 = vrot.lane.b32.xlu0 %v1340, 20
      %v1376 = vpop.permute.xlu0 %1375
      %1377 = vrot.lane.b32.xlu0 %v1343, 20
      %v1378 = vpop.permute.xlu0 %1377
      %1379 = vrot.lane.b32.xlu0 %v1346, 20
      %v1380 = vpop.permute.xlu0 %1379
      %1381 = vrot.lane.b32.xlu0 %v1349, 20
      %v1382 = vpop.permute.xlu0 %1381
      %1383 = vrot.lane.b32.xlu0 %v1352, 20
      %v1384 = vpop.permute.xlu0 %1383
      %v1417 = vunpack.c.l.b16 %v327
      %v1418 = vunpack.c.l.b16 %v328
      %v1419 = vunpack.c.l.b16 %v329
      %v1420 = vunpack.c.l.b16 %v330
      %v1421 = vunpack.c.l.b16 %v331
      %v1422 = vunpack.c.l.b16 %v332
      %v1423 = vunpack.c.l.b16 %v333
      %v1424 = vunpack.c.l.b16 %v334
      %v1425 = vunpack.c.l.b16 %v335
      %v1426 = vunpack.c.l.b16 %v336
      %v1427 = vunpack.c.l.b16 %v337
      %v1428 = vunpack.c.l.b16 %v338
      %v1429 = vunpack.c.l.b16 %v339
      %v1430 = vunpack.c.l.b16 %v340
      %v1431 = vunpack.c.l.b16 %v341
      %v1432 = vunpack.c.l.b16 %v342
      %v1433 = vunpack.c.l.b16 %v343
      %v1434 = vunpack.c.l.b16 %v344
      %v1435 = vunpack.c.l.b16 %v345
      %v1436 = vunpack.c.l.b16 %v346
      %v1437 = vunpack.c.l.b16 %v347
      %v1438 = vunpack.c.l.b16 %v348
      %v1439 = vunpack.c.l.b16 %v349
      %v1440 = vunpack.c.l.b16 %v350
      %v1441 = vunpack.c.l.b16 %v351
      %v1442 = vunpack.c.l.b16 %v352
      %v1443 = vunpack.c.l.b16 %v353
      %v1444 = vunpack.c.l.b16 %v354
      %v1445 = vunpack.c.l.b16 %v355
      %v1446 = vunpack.c.l.b16 %v356
      %v1447 = vunpack.c.l.b16 %v357
      %v1448 = vunpack.c.l.b16 %v358
      %v1449 = vpack.c.b16 %v1418, %v1417
      %v1450 = vpack.c.b16 %v1420, %v1419
      %v1451 = vpack.c.b16 %v1422, %v1421
      %v1452 = vpack.c.b16 %v1424, %v1423
      %v1453 = vpack.c.b16 %v1426, %v1425
      %v1454 = vpack.c.b16 %v1428, %v1427
      %v1455 = vpack.c.b16 %v1430, %v1429
      %v1456 = vpack.c.b16 %v1432, %v1431
      %v1457 = vpack.c.b16 %v1434, %v1433
      %v1458 = vpack.c.b16 %v1436, %v1435
      %v1459 = vpack.c.b16 %v1438, %v1437
      %v1460 = vpack.c.b16 %v1440, %v1439
      %v1461 = vpack.c.b16 %v1442, %v1441
      %v1462 = vpack.c.b16 %v1444, %v1443
      %v1463 = vpack.c.b16 %v1446, %v1445
      %v1464 = vpack.c.b16 %v1448, %v1447
      %1465 = vrot.lane.b32.xlu0 %v1449, 24
      %v1466 = vpop.permute.xlu0 %1465
      %1467 = vrot.lane.b32.xlu0 %v1450, 24
      %v1468 = vpop.permute.xlu0 %1467
      %1469 = vrot.lane.b32.xlu0 %v1451, 24
      %v1470 = vpop.permute.xlu0 %1469
      %1471 = vrot.lane.b32.xlu0 %v1452, 24
      %v1472 = vpop.permute.xlu0 %1471
      %1473 = vrot.lane.b32.xlu0 %v1453, 24
      %v1474 = vpop.permute.xlu0 %1473
      %1475 = vrot.lane.b32.xlu0 %v1454, 24
      %v1476 = vpop.permute.xlu0 %1475
      %1477 = vrot.lane.b32.xlu0 %v1455, 24
      %v1478 = vpop.permute.xlu0 %1477
      %1479 = vrot.lane.b32.xlu0 %v1456, 24
      %v1480 = vpop.permute.xlu0 %1479
      %1481 = vrot.lane.b32.xlu0 %v1457, 24
      %v1482 = vpop.permute.xlu0 %1481
      %1483 = vrot.lane.b32.xlu0 %v1458, 24
      %v1484 = vpop.permute.xlu0 %1483
      %1485 = vrot.lane.b32.xlu0 %v1459, 24
      %v1486 = vpop.permute.xlu0 %1485
      %1487 = vrot.lane.b32.xlu0 %v1460, 24
      %v1488 = vpop.permute.xlu0 %1487
      %1489 = vrot.lane.b32.xlu0 %v1461, 24
      %v1490 = vpop.permute.xlu0 %1489
      %1491 = vrot.lane.b32.xlu0 %v1462, 24
      %v1492 = vpop.permute.xlu0 %1491
      %1493 = vrot.lane.b32.xlu0 %v1463, 24
      %v1494 = vpop.permute.xlu0 %1493
      %1495 = vrot.lane.b32.xlu0 %v1464, 24
      %v1496 = vpop.permute.xlu0 %1495
      %v1513 = vunpack.c.l.b16 %v359
      %v1514 = vunpack.c.l.b16 %v360
      %v1515 = vunpack.c.l.b16 %v361
      %v1516 = vunpack.c.l.b16 %v362
      %v1517 = vunpack.c.l.b16 %v363
      %v1518 = vunpack.c.l.b16 %v364
      %v1519 = vunpack.c.l.b16 %v365
      %v1520 = vunpack.c.l.b16 %v366
      %v1521 = vunpack.c.l.b16 %v367
      %v1522 = vunpack.c.l.b16 %v368
      %v1523 = vunpack.c.l.b16 %v369
      %v1524 = vunpack.c.l.b16 %v370
      %v1525 = vunpack.c.l.b16 %v371
      %v1526 = vunpack.c.l.b16 %v372
      %v1527 = vunpack.c.l.b16 %v373
      %v1528 = vunpack.c.l.b16 %v374
      %v1529 = vpack.c.b16 %v1513, %v1513
      %v1530 = vpack.c.b16 %v1514, %v1514
      %v1531 = vpack.c.b16 %v1515, %v1515
      %v1532 = vpack.c.b16 %v1516, %v1516
      %v1533 = vpack.c.b16 %v1517, %v1517
      %v1534 = vpack.c.b16 %v1518, %v1518
      %v1535 = vpack.c.b16 %v1519, %v1519
      %v1536 = vpack.c.b16 %v1520, %v1520
      %v1537 = vpack.c.b16 %v1521, %v1521
      %v1538 = vpack.c.b16 %v1522, %v1522
      %v1539 = vpack.c.b16 %v1523, %v1523
      %v1540 = vpack.c.b16 %v1524, %v1524
      %v1541 = vpack.c.b16 %v1525, %v1525
      %v1542 = vpack.c.b16 %v1526, %v1526
      %v1543 = vpack.c.b16 %v1527, %v1527
      %v1544 = vpack.c.b16 %v1528, %v1528
      %v1546 = vshrl.u32 %v1449, 16
      %v1548 = vshll.u32 %v1449, 16
      %v1550 = vrot.slane %v1548, 1
      %v1551 = vor.u32 %v1546, %v1550
      %v1553 = vshll.u32 %v1529, 16
      %v1555 = vrot.slane %v1553, 1
      %v1556 = vsel %vm519, %v1551, %v1555
      %v1558 = vshrl.u32 %v1450, 16
      %v1560 = vshll.u32 %v1450, 16
      %v1562 = vrot.slane %v1560, 1
      %v1563 = vor.u32 %v1558, %v1562
      %v1565 = vshll.u32 %v1530, 16
      %v1567 = vrot.slane %v1565, 1
      %v1568 = vsel %vm519, %v1563, %v1567
      %v1570 = vshrl.u32 %v1451, 16
      %v1572 = vshll.u32 %v1451, 16
      %v1574 = vrot.slane %v1572, 1
      %v1575 = vor.u32 %v1570, %v1574
      %v1577 = vshll.u32 %v1531, 16
      %v1579 = vrot.slane %v1577, 1
      %v1580 = vsel %vm519, %v1575, %v1579
      %v1582 = vshrl.u32 %v1452, 16
      %v1584 = vshll.u32 %v1452, 16
      %v1586 = vrot.slane %v1584, 1
      %v1587 = vor.u32 %v1582, %v1586
      %v1589 = vshll.u32 %v1532, 16
      %v1591 = vrot.slane %v1589, 1
      %v1592 = vsel %vm519, %v1587, %v1591
      %v1594 = vshrl.u32 %v1453, 16
      %v1596 = vshll.u32 %v1453, 16
      %v1598 = vrot.slane %v1596, 1
      %v1599 = vor.u32 %v1594, %v1598
      %v1601 = vshll.u32 %v1533, 16
      %v1603 = vrot.slane %v1601, 1
      %v1604 = vsel %vm519, %v1599, %v1603
      %v1606 = vshrl.u32 %v1454, 16
      %v1608 = vshll.u32 %v1454, 16
      %v1610 = vrot.slane %v1608, 1
      %v1611 = vor.u32 %v1606, %v1610
      %v1613 = vshll.u32 %v1534, 16
      %v1615 = vrot.slane %v1613, 1
      %v1616 = vsel %vm519, %v1611, %v1615
      %v1618 = vshrl.u32 %v1455, 16
      %v1620 = vshll.u32 %v1455, 16
      %v1622 = vrot.slane %v1620, 1
      %v1623 = vor.u32 %v1618, %v1622
      %v1625 = vshll.u32 %v1535, 16
      %v1627 = vrot.slane %v1625, 1
      %v1628 = vsel %vm519, %v1623, %v1627
      %v1630 = vshrl.u32 %v1456, 16
      %v1632 = vshll.u32 %v1456, 16
      %v1634 = vrot.slane %v1632, 1
      %v1635 = vor.u32 %v1630, %v1634
      %v1637 = vshll.u32 %v1536, 16
      %v1639 = vrot.slane %v1637, 1
      %v1640 = vsel %vm519, %v1635, %v1639
      %v1642 = vshrl.u32 %v1457, 16
      %v1644 = vshll.u32 %v1457, 16
      %v1646 = vrot.slane %v1644, 1
      %v1647 = vor.u32 %v1642, %v1646
      %v1649 = vshll.u32 %v1537, 16
      %v1651 = vrot.slane %v1649, 1
      %v1652 = vsel %vm519, %v1647, %v1651
      %v1654 = vshrl.u32 %v1458, 16
      %v1656 = vshll.u32 %v1458, 16
      %v1658 = vrot.slane %v1656, 1
      %v1659 = vor.u32 %v1654, %v1658
      %v1661 = vshll.u32 %v1538, 16
      %v1663 = vrot.slane %v1661, 1
      %v1664 = vsel %vm519, %v1659, %v1663
      %v1666 = vshrl.u32 %v1459, 16
      %v1668 = vshll.u32 %v1459, 16
      %v1670 = vrot.slane %v1668, 1
      %v1671 = vor.u32 %v1666, %v1670
      %v1673 = vshll.u32 %v1539, 16
      %v1675 = vrot.slane %v1673, 1
      %v1676 = vsel %vm519, %v1671, %v1675
      %v1678 = vshrl.u32 %v1460, 16
      %v1680 = vshll.u32 %v1460, 16
      %v1682 = vrot.slane %v1680, 1
      %v1683 = vor.u32 %v1678, %v1682
      %v1685 = vshll.u32 %v1540, 16
      %v1687 = vrot.slane %v1685, 1
      %v1688 = vsel %vm519, %v1683, %v1687
      %v1690 = vshrl.u32 %v1461, 16
      %v1692 = vshll.u32 %v1461, 16
      %v1694 = vrot.slane %v1692, 1
      %v1695 = vor.u32 %v1690, %v1694
      %v1697 = vshll.u32 %v1541, 16
      %v1699 = vrot.slane %v1697, 1
      %v1700 = vsel %vm519, %v1695, %v1699
      %v1702 = vshrl.u32 %v1462, 16
      %v1704 = vshll.u32 %v1462, 16
      %v1706 = vrot.slane %v1704, 1
      %v1707 = vor.u32 %v1702, %v1706
      %v1709 = vshll.u32 %v1542, 16
      %v1711 = vrot.slane %v1709, 1
      %v1712 = vsel %vm519, %v1707, %v1711
      %v1714 = vshrl.u32 %v1463, 16
      %v1716 = vshll.u32 %v1463, 16
      %v1718 = vrot.slane %v1716, 1
      %v1719 = vor.u32 %v1714, %v1718
      %v1721 = vshll.u32 %v1543, 16
      %v1723 = vrot.slane %v1721, 1
      %v1724 = vsel %vm519, %v1719, %v1723
      %v1726 = vshrl.u32 %v1464, 16
      %v1728 = vshll.u32 %v1464, 16
      %v1730 = vrot.slane %v1728, 1
      %v1731 = vor.u32 %v1726, %v1730
      %v1733 = vshll.u32 %v1544, 16
      %v1735 = vrot.slane %v1733, 1
      %v1736 = vsel %vm519, %v1731, %v1735
      %1737 = vrot.lane.b32.xlu0 %v1556, 28
      %v1738 = vpop.permute.xlu0 %1737
      %1739 = vrot.lane.b32.xlu0 %v1568, 28
      %v1740 = vpop.permute.xlu0 %1739
      %1741 = vrot.lane.b32.xlu0 %v1580, 28
      %v1742 = vpop.permute.xlu0 %1741
      %1743 = vrot.lane.b32.xlu0 %v1592, 28
      %v1744 = vpop.permute.xlu0 %1743
      %1745 = vrot.lane.b32.xlu0 %v1604, 28
      %v1746 = vpop.permute.xlu0 %1745
      %1747 = vrot.lane.b32.xlu0 %v1616, 28
      %v1748 = vpop.permute.xlu0 %1747
      %1749 = vrot.lane.b32.xlu0 %v1628, 28
      %v1750 = vpop.permute.xlu0 %1749
      %1751 = vrot.lane.b32.xlu0 %v1640, 28
      %v1752 = vpop.permute.xlu0 %1751
      %1753 = vrot.lane.b32.xlu0 %v1652, 28
      %v1754 = vpop.permute.xlu0 %1753
      %1755 = vrot.lane.b32.xlu0 %v1664, 28
      %v1756 = vpop.permute.xlu0 %1755
      %1757 = vrot.lane.b32.xlu0 %v1676, 28
      %v1758 = vpop.permute.xlu0 %1757
      %1759 = vrot.lane.b32.xlu0 %v1688, 28
      %v1760 = vpop.permute.xlu0 %1759
      %1761 = vrot.lane.b32.xlu0 %v1700, 28
      %v1762 = vpop.permute.xlu0 %1761
      %1763 = vrot.lane.b32.xlu0 %v1712, 28
      %v1764 = vpop.permute.xlu0 %1763
      %1765 = vrot.lane.b32.xlu0 %v1724, 28
      %v1766 = vpop.permute.xlu0 %1765
      %1767 = vrot.lane.b32.xlu0 %v1736, 28
      %v1768 = vpop.permute.xlu0 %1767
      %v1785 = vunpack.c.l.b16 %v375
      %v1786 = vunpack.c.l.b16 %v376
      %v1787 = vunpack.c.l.b16 %v377
      %v1788 = vunpack.c.l.b16 %v378
      %v1789 = vunpack.c.l.b16 %v379
      %v1790 = vunpack.c.l.b16 %v380
      %v1791 = vunpack.c.l.b16 %v381
      %v1792 = vunpack.c.l.b16 %v382
      %v1793 = vunpack.c.l.b16 %v383
      %v1794 = vunpack.c.l.b16 %v384
      %v1795 = vunpack.c.l.b16 %v385
      %v1796 = vunpack.c.l.b16 %v386
      %v1797 = vunpack.c.l.b16 %v387
      %v1798 = vunpack.c.l.b16 %v388
      %v1799 = vunpack.c.l.b16 %v389
      %v1800 = vunpack.c.l.b16 %v390
      %v1801 = vpack.c.b16 %v1418, %v1785
      %v1802 = vpack.c.b16 %v1420, %v1786
      %v1803 = vpack.c.b16 %v1422, %v1787
      %v1804 = vpack.c.b16 %v1424, %v1788
      %v1805 = vpack.c.b16 %v1426, %v1789
      %v1806 = vpack.c.b16 %v1428, %v1790
      %v1807 = vpack.c.b16 %v1430, %v1791
      %v1808 = vpack.c.b16 %v1432, %v1792
      %v1809 = vpack.c.b16 %v1434, %v1793
      %v1810 = vpack.c.b16 %v1436, %v1794
      %v1811 = vpack.c.b16 %v1438, %v1795
      %v1812 = vpack.c.b16 %v1440, %v1796
      %v1813 = vpack.c.b16 %v1442, %v1797
      %v1814 = vpack.c.b16 %v1444, %v1798
      %v1815 = vpack.c.b16 %v1446, %v1799
      %v1816 = vpack.c.b16 %v1448, %v1800
      %v1817 = vrot.slane %v1801, 1
      %v1818 = vrot.slane %v1529, 1
      %v1819 = vsel %vm792, %v1817, %v1818
      %v1820 = vrot.slane %v1802, 1
      %v1821 = vrot.slane %v1530, 1
      %v1822 = vsel %vm792, %v1820, %v1821
      %v1823 = vrot.slane %v1803, 1
      %v1824 = vrot.slane %v1531, 1
      %v1825 = vsel %vm792, %v1823, %v1824
      %v1826 = vrot.slane %v1804, 1
      %v1827 = vrot.slane %v1532, 1
      %v1828 = vsel %vm792, %v1826, %v1827
      %v1829 = vrot.slane %v1805, 1
      %v1830 = vrot.slane %v1533, 1
      %v1831 = vsel %vm792, %v1829, %v1830
      %v1832 = vrot.slane %v1806, 1
      %v1833 = vrot.slane %v1534, 1
      %v1834 = vsel %vm792, %v1832, %v1833
      %v1835 = vrot.slane %v1807, 1
      %v1836 = vrot.slane %v1535, 1
      %v1837 = vsel %vm792, %v1835, %v1836
      %v1838 = vrot.slane %v1808, 1
      %v1839 = vrot.slane %v1536, 1
      %v1840 = vsel %vm792, %v1838, %v1839
      %v1841 = vrot.slane %v1809, 1
      %v1842 = vrot.slane %v1537, 1
      %v1843 = vsel %vm792, %v1841, %v1842
      %v1844 = vrot.slane %v1810, 1
      %v1845 = vrot.slane %v1538, 1
      %v1846 = vsel %vm792, %v1844, %v1845
      %v1847 = vrot.slane %v1811, 1
      %v1848 = vrot.slane %v1539, 1
      %v1849 = vsel %vm792, %v1847, %v1848
      %v1850 = vrot.slane %v1812, 1
      %v1851 = vrot.slane %v1540, 1
      %v1852 = vsel %vm792, %v1850, %v1851
      %v1853 = vrot.slane %v1813, 1
      %v1854 = vrot.slane %v1541, 1
      %v1855 = vsel %vm792, %v1853, %v1854
      %v1856 = vrot.slane %v1814, 1
      %v1857 = vrot.slane %v1542, 1
      %v1858 = vsel %vm792, %v1856, %v1857
      %v1859 = vrot.slane %v1815, 1
      %v1860 = vrot.slane %v1543, 1
      %v1861 = vsel %vm792, %v1859, %v1860
      %v1862 = vrot.slane %v1816, 1
      %v1863 = vrot.slane %v1544, 1
      %v1864 = vsel %vm792, %v1862, %v1863
      %1865 = vrot.lane.b32.xlu0 %v1819, 32
      %v1866 = vpop.permute.xlu0 %1865
      %1867 = vrot.lane.b32.xlu0 %v1822, 32
      %v1868 = vpop.permute.xlu0 %1867
      %1869 = vrot.lane.b32.xlu0 %v1825, 32
      %v1870 = vpop.permute.xlu0 %1869
      %1871 = vrot.lane.b32.xlu0 %v1828, 32
      %v1872 = vpop.permute.xlu0 %1871
      %1873 = vrot.lane.b32.xlu0 %v1831, 32
      %v1874 = vpop.permute.xlu0 %1873
      %1875 = vrot.lane.b32.xlu0 %v1834, 32
      %v1876 = vpop.permute.xlu0 %1875
      %1877 = vrot.lane.b32.xlu0 %v1837, 32
      %v1878 = vpop.permute.xlu0 %1877
      %1879 = vrot.lane.b32.xlu0 %v1840, 32
      %v1880 = vpop.permute.xlu0 %1879
      %1881 = vrot.lane.b32.xlu0 %v1843, 32
      %v1882 = vpop.permute.xlu0 %1881
      %1883 = vrot.lane.b32.xlu0 %v1846, 32
      %v1884 = vpop.permute.xlu0 %1883
      %1885 = vrot.lane.b32.xlu0 %v1849, 32
      %v1886 = vpop.permute.xlu0 %1885
      %1887 = vrot.lane.b32.xlu0 %v1852, 32
      %v1888 = vpop.permute.xlu0 %1887
      %1889 = vrot.lane.b32.xlu0 %v1855, 32
      %v1890 = vpop.permute.xlu0 %1889
      %1891 = vrot.lane.b32.xlu0 %v1858, 32
      %v1892 = vpop.permute.xlu0 %1891
      %1893 = vrot.lane.b32.xlu0 %v1861, 32
      %v1894 = vpop.permute.xlu0 %1893
      %1895 = vrot.lane.b32.xlu0 %v1864, 32
      %v1896 = vpop.permute.xlu0 %1895
      %vm1897 = vcmask 31744
      %v1899 = vsel %vm1897, %v455, %v713
      %v1901 = vsel %vm1897, %v456, %v715
      %v1903 = vsel %vm1897, %v457, %v717
      %v1905 = vsel %vm1897, %v458, %v719
      %v1907 = vsel %vm1897, %v459, %v721
      %v1909 = vsel %vm1897, %v460, %v723
      %v1911 = vsel %vm1897, %v461, %v725
      %v1913 = vsel %vm1897, %v462, %v727
      %v1915 = vsel %vm1897, %v463, %v729
      %v1917 = vsel %vm1897, %v464, %v731
      %v1919 = vsel %vm1897, %v465, %v733
      %v1921 = vsel %vm1897, %v466, %v735
      %v1923 = vsel %vm1897, %v467, %v737
      %v1925 = vsel %vm1897, %v468, %v739
      %v1927 = vsel %vm1897, %v469, %v741
      %v1929 = vsel %vm1897, %v470, %v743
      %vm1930 = vcmask 64512
      %v1932 = vsel %vm1930, %v1899, %v842
      %v1934 = vsel %vm1930, %v1901, %v844
      %v1936 = vsel %vm1930, %v1903, %v846
      %v1938 = vsel %vm1930, %v1905, %v848
      %v1940 = vsel %vm1930, %v1907, %v850
      %v1942 = vsel %vm1930, %v1909, %v852
      %v1944 = vsel %vm1930, %v1911, %v854
      %v1946 = vsel %vm1930, %v1913, %v856
      %v1948 = vsel %vm1930, %v1915, %v858
      %v1950 = vsel %vm1930, %v1917, %v860
      %v1952 = vsel %vm1930, %v1919, %v862
      %v1954 = vsel %vm1930, %v1921, %v864
      %v1956 = vsel %vm1930, %v1923, %v866
      %v1958 = vsel %vm1930, %v1925, %v868
      %v1960 = vsel %vm1930, %v1927, %v870
      %v1962 = vsel %vm1930, %v1929, %v872
      %vm1963 = vcmask 97280
      %v1965 = vsel %vm1963, %v1932, %v954
      %v1967 = vsel %vm1963, %v1934, %v956
      %v1969 = vsel %vm1963, %v1936, %v958
      %v1971 = vsel %vm1963, %v1938, %v960
      %v1973 = vsel %vm1963, %v1940, %v962
      %v1975 = vsel %vm1963, %v1942, %v964
      %v1977 = vsel %vm1963, %v1944, %v966
      %v1979 = vsel %vm1963, %v1946, %v968
      %v1981 = vsel %vm1963, %v1948, %v970
      %v1983 = vsel %vm1963, %v1950, %v972
      %v1985 = vsel %vm1963, %v1952, %v974
      %v1987 = vsel %vm1963, %v1954, %v976
      %v1989 = vsel %vm1963, %v1956, %v978
      %v1991 = vsel %vm1963, %v1958, %v980
      %v1993 = vsel %vm1963, %v1960, %v982
      %v1995 = vsel %vm1963, %v1962, %v984
      %vm1996 = vcmask 130048
      %v1998 = vsel %vm1996, %v1965, %v1226
      %v2000 = vsel %vm1996, %v1967, %v1228
      %v2002 = vsel %vm1996, %v1969, %v1230
      %v2004 = vsel %vm1996, %v1971, %v1232
      %v2006 = vsel %vm1996, %v1973, %v1234
      %v2008 = vsel %vm1996, %v1975, %v1236
      %v2010 = vsel %vm1996, %v1977, %v1238
      %v2012 = vsel %vm1996, %v1979, %v1240
      %v2014 = vsel %vm1996, %v1981, %v1242
      %v2016 = vsel %vm1996, %v1983, %v1244
      %v2018 = vsel %vm1996, %v1985, %v1246
      %v2020 = vsel %vm1996, %v1987, %v1248
      %v2022 = vsel %vm1996, %v1989, %v1250
      %v2024 = vsel %vm1996, %v1991, %v1252
      %v2026 = vsel %vm1996, %v1993, %v1254
      %v2028 = vsel %vm1996, %v1995, %v1256
      %vm2029 = vcmask 162816
      %v2031 = vsel %vm2029, %v1998, %v1354
      %v2033 = vsel %vm2029, %v2000, %v1356
      %v2035 = vsel %vm2029, %v2002, %v1358
      %v2037 = vsel %vm2029, %v2004, %v1360
      %v2039 = vsel %vm2029, %v2006, %v1362
      %v2041 = vsel %vm2029, %v2008, %v1364
      %v2043 = vsel %vm2029, %v2010, %v1366
      %v2045 = vsel %vm2029, %v2012, %v1368
      %v2047 = vsel %vm2029, %v2014, %v1370
      %v2049 = vsel %vm2029, %v2016, %v1372
      %v2051 = vsel %vm2029, %v2018, %v1374
      %v2053 = vsel %vm2029, %v2020, %v1376
      %v2055 = vsel %vm2029, %v2022, %v1378
      %v2057 = vsel %vm2029, %v2024, %v1380
      %v2059 = vsel %vm2029, %v2026, %v1382
      %v2061 = vsel %vm2029, %v2028, %v1384
      %vm2062 = vcmask 195584
      %v2064 = vsel %vm2062, %v2031, %v1466
      %v2066 = vsel %vm2062, %v2033, %v1468
      %v2068 = vsel %vm2062, %v2035, %v1470
      %v2070 = vsel %vm2062, %v2037, %v1472
      %v2072 = vsel %vm2062, %v2039, %v1474
      %v2074 = vsel %vm2062, %v2041, %v1476
      %v2076 = vsel %vm2062, %v2043, %v1478
      %v2078 = vsel %vm2062, %v2045, %v1480
      %v2080 = vsel %vm2062, %v2047, %v1482
      %v2082 = vsel %vm2062, %v2049, %v1484
      %v2084 = vsel %vm2062, %v2051, %v1486
      %v2086 = vsel %vm2062, %v2053, %v1488
      %v2088 = vsel %vm2062, %v2055, %v1490
      %v2090 = vsel %vm2062, %v2057, %v1492
      %v2092 = vsel %vm2062, %v2059, %v1494
      %v2094 = vsel %vm2062, %v2061, %v1496
      %vm2095 = vcmask 228352
      %v2097 = vsel %vm2095, %v2064, %v1738
      %v2099 = vsel %vm2095, %v2066, %v1740
      %v2101 = vsel %vm2095, %v2068, %v1742
      %v2103 = vsel %vm2095, %v2070, %v1744
      %v2105 = vsel %vm2095, %v2072, %v1746
      %v2107 = vsel %vm2095, %v2074, %v1748
      %v2109 = vsel %vm2095, %v2076, %v1750
      %v2111 = vsel %vm2095, %v2078, %v1752
      %v2113 = vsel %vm2095, %v2080, %v1754
      %v2115 = vsel %vm2095, %v2082, %v1756
      %v2117 = vsel %vm2095, %v2084, %v1758
      %v2119 = vsel %vm2095, %v2086, %v1760
      %v2121 = vsel %vm2095, %v2088, %v1762
      %v2123 = vsel %vm2095, %v2090, %v1764
      %v2125 = vsel %vm2095, %v2092, %v1766
      %v2127 = vsel %vm2095, %v2094, %v1768
      %vm2128 = vcmask 261120
      %v2130 = vsel %vm2128, %v2097, %v1866
      %v2132 = vsel %vm2128, %v2099, %v1868
      %v2134 = vsel %vm2128, %v2101, %v1870
      %v2136 = vsel %vm2128, %v2103, %v1872
      %v2138 = vsel %vm2128, %v2105, %v1874
      %v2140 = vsel %vm2128, %v2107, %v1876
      %v2142 = vsel %vm2128, %v2109, %v1878
      %v2144 = vsel %vm2128, %v2111, %v1880
      %v2146 = vsel %vm2128, %v2113, %v1882
      %v2148 = vsel %vm2128, %v2115, %v1884
      %v2150 = vsel %vm2128, %v2117, %v1886
      %v2152 = vsel %vm2128, %v2119, %v1888
      %v2154 = vsel %vm2128, %v2121, %v1890
      %v2156 = vsel %vm2128, %v2123, %v1892
      %v2158 = vsel %vm2128, %v2125, %v1894
      %v2160 = vsel %vm2128, %v2127, %v1896
      %v2161 = vld [vmem:[%s1] sm:$0xf]
      %v2162 = vld [vmem:[%s1 + $0x4] sm:$0xf]
      %v2163 = vld [vmem:[%s1 + $0x8] sm:$0xf]
      %v2164 = vld [vmem:[%s1 + $0xc] sm:$0xf]
      %v2165 = vld [vmem:[%s1 + $0x10] sm:$0x3]
      %v2166 = vld [vmem:[%s2] sm:$0x1]
      %v2168 = vperm.slane %v2166, 0
      %v2175 = vunpack.c.l.b16 %v2161
      %v2176 = vunpack.c.l.b16 %v2162
      %v2177 = vunpack.c.l.b16 %v2163
      %v2178 = vunpack.c.l.b16 %v2164
      %v2179 = vunpack.c.l.b16 %v2165
      %v2180 = vpack.c.b16 %v2176, %v2175
      %v2181 = vpack.c.b16 %v2178, %v2177
      %v2182 = vpack.c.b16 %v2179, %v2179
      %vm2185 = vcmask 293888
      %v2186 = vsel %vm2185, %v2130, 0
      %v2188 = vsel %vm2185, %v2132, 0
      %v2190 = vsel %vm2185, %v2134, 0
      %v2192 = vsel %vm2185, %v2136, 0
      %v2194 = vsel %vm2185, %v2138, 0
      %v2196 = vsel %vm2185, %v2140, 0
      %v2198 = vsel %vm2185, %v2142, 0
      %v2200 = vsel %vm2185, %v2144, 0
      %v2202 = vsel %vm2185, %v2146, 0
      %v2204 = vsel %vm2185, %v2148, 0
      %v2206 = vsel %vm2185, %v2150, 0
      %v2208 = vsel %vm2185, %v2152, 0
      %v2210 = vsel %vm2185, %v2154, 0
      %v2212 = vsel %vm2185, %v2156, 0
      %v2214 = vsel %vm2185, %v2158, 0
      %v2216 = vsel %vm2185, %v2160, 0
      %vm2218 = vcmask 1041408
      %v2220 = vsel %vm2218, %v2182, 0
      %2222 = vmatpush.bf16.msra.mxu0 0
      %2223 = vmatpush.bf16.msra.mxu0 0
      %2224 = vmatpush.bf16.msra.mxu0 0
      %2225 = vmatpush.bf16.msra.mxu0 0
      %2226 = vmatpush.bf16.msra.mxu0 0
      %2227 = vmatpush.bf16.msra.mxu0 %v2220
      %2228 = vmatpush.bf16.msra.mxu0 %v2181
      %2229 = vmatpush.bf16.msra.mxu0 %v2180
      %2230 = vmatmul.bf16.gmra.mxu0 %v2186
      %v2231 = vpop.f32.mrf.mxu0
      %v2232 = vadd.f32 %v2168, %v2231
      %v2233 = vpop.f32.mrf.mxu0
      %v2234 = vadd.f32 %v2168, %v2233
      %2235 = vmatmul.bf16.gmra.mxu0 %v2188
      %v2236 = vpop.f32.mrf.mxu0
      %v2237 = vadd.f32 %v2168, %v2236
      %v2238 = vpop.f32.mrf.mxu0
      %v2239 = vadd.f32 %v2168, %v2238
      %2240 = vmatmul.bf16.gmra.mxu0 %v2190
      %v2241 = vpop.f32.mrf.mxu0
      %v2242 = vadd.f32 %v2168, %v2241
      %v2243 = vpop.f32.mrf.mxu0
      %v2244 = vadd.f32 %v2168, %v2243
      %2245 = vmatmul.bf16.gmra.mxu0 %v2192
      %v2246 = vpop.f32.mrf.mxu0
      %v2247 = vadd.f32 %v2168, %v2246
      %v2248 = vpop.f32.mrf.mxu0
      %v2249 = vadd.f32 %v2168, %v2248
      %2250 = vmatmul.bf16.gmra.mxu0 %v2194
      %v2251 = vpop.f32.mrf.mxu0
      %v2252 = vadd.f32 %v2168, %v2251
      %v2253 = vpop.f32.mrf.mxu0
      %v2254 = vadd.f32 %v2168, %v2253
      %2255 = vmatmul.bf16.gmra.mxu0 %v2196
      %v2256 = vpop.f32.mrf.mxu0
      %v2257 = vadd.f32 %v2168, %v2256
      %v2258 = vpop.f32.mrf.mxu0
      %v2259 = vadd.f32 %v2168, %v2258
      %2260 = vmatmul.bf16.gmra.mxu0 %v2198
      %v2261 = vpop.f32.mrf.mxu0
      %v2262 = vadd.f32 %v2168, %v2261
      %v2263 = vpop.f32.mrf.mxu0
      %v2264 = vadd.f32 %v2168, %v2263
      %2265 = vmatmul.bf16.gmra.mxu0 %v2200
      %v2266 = vpop.f32.mrf.mxu0
      %v2267 = vadd.f32 %v2168, %v2266
      %v2268 = vpop.f32.mrf.mxu0
      %v2269 = vadd.f32 %v2168, %v2268
      %2270 = vmatmul.bf16.gmra.mxu0 %v2202
      %v2271 = vpop.f32.mrf.mxu0
      %v2272 = vadd.f32 %v2168, %v2271
      %v2273 = vpop.f32.mrf.mxu0
      %v2274 = vadd.f32 %v2168, %v2273
      %2275 = vmatmul.bf16.gmra.mxu0 %v2204
      %v2276 = vpop.f32.mrf.mxu0
      %v2277 = vadd.f32 %v2168, %v2276
      %v2278 = vpop.f32.mrf.mxu0
      %v2279 = vadd.f32 %v2168, %v2278
      %2280 = vmatmul.bf16.gmra.mxu0 %v2206
      %v2281 = vpop.f32.mrf.mxu0
      %v2282 = vadd.f32 %v2168, %v2281
      %v2283 = vpop.f32.mrf.mxu0
      %v2284 = vadd.f32 %v2168, %v2283
      %2285 = vmatmul.bf16.gmra.mxu0 %v2208
      %v2286 = vpop.f32.mrf.mxu0
      %v2287 = vadd.f32 %v2168, %v2286
      %v2288 = vpop.f32.mrf.mxu0
      %v2289 = vadd.f32 %v2168, %v2288
      %2290 = vmatmul.bf16.gmra.mxu0 %v2210
      %v2291 = vpop.f32.mrf.mxu0
      %v2292 = vadd.f32 %v2168, %v2291
      %v2293 = vpop.f32.mrf.mxu0
      %v2294 = vadd.f32 %v2168, %v2293
      %2295 = vmatmul.bf16.gmra.mxu0 %v2212
      %v2296 = vpop.f32.mrf.mxu0
      %v2297 = vadd.f32 %v2168, %v2296
      %v2298 = vpop.f32.mrf.mxu0
      %v2299 = vadd.f32 %v2168, %v2298
      %2300 = vmatmul.bf16.gmra.mxu0 %v2214
      %v2301 = vpop.f32.mrf.mxu0
      %v2302 = vadd.f32 %v2168, %v2301
      %v2303 = vpop.f32.mrf.mxu0
      %v2304 = vadd.f32 %v2168, %v2303
      %2305 = vmatmul.bf16.gmra.mxu0 %v2216
      %v2306 = vpop.f32.mrf.mxu0
      %v2307 = vadd.f32 %v2168, %v2306
      %v2308 = vpop.f32.mrf.mxu0
      %v2309 = vadd.f32 %v2168, %v2308
      %2310 = vdwg.mxu0
      %v2311 = vmax.f32 %v2232, 0.0
      %v2312 = vmax.f32 %v2234, 0.0
      %v2313 = vmax.f32 %v2237, 0.0
      %v2314 = vmax.f32 %v2239, 0.0
      %v2315 = vmax.f32 %v2242, 0.0
      %v2316 = vmax.f32 %v2244, 0.0
      %v2317 = vmax.f32 %v2247, 0.0
      %v2318 = vmax.f32 %v2249, 0.0
      %v2319 = vmax.f32 %v2252, 0.0
      %v2320 = vmax.f32 %v2254, 0.0
      %v2321 = vmax.f32 %v2257, 0.0
      %v2322 = vmax.f32 %v2259, 0.0
      %v2323 = vmax.f32 %v2262, 0.0
      %v2324 = vmax.f32 %v2264, 0.0
      %v2325 = vmax.f32 %v2267, 0.0
      %v2326 = vmax.f32 %v2269, 0.0
      %v2327 = vmax.f32 %v2272, 0.0
      %v2328 = vmax.f32 %v2274, 0.0
      %v2329 = vmax.f32 %v2277, 0.0
      %v2330 = vmax.f32 %v2279, 0.0
      %v2331 = vmax.f32 %v2282, 0.0
      %v2332 = vmax.f32 %v2284, 0.0
      %v2333 = vmax.f32 %v2287, 0.0
      %v2334 = vmax.f32 %v2289, 0.0
      %v2335 = vmax.f32 %v2292, 0.0
      %v2336 = vmax.f32 %v2294, 0.0
      %v2337 = vmax.f32 %v2297, 0.0
      %v2338 = vmax.f32 %v2299, 0.0
      %v2339 = vmax.f32 %v2302, 0.0
      %v2340 = vmax.f32 %v2304, 0.0
      %v2341 = vmax.f32 %v2307, 0.0
      %v2342 = vmax.f32 %v2309, 0.0
      %v2343 = vpack.c.bf16 %v2311, %v2311
      %v2344 = vpack.c.bf16 %v2312, %v2312
      %v2345 = vpack.c.bf16 %v2313, %v2313
      %v2346 = vpack.c.bf16 %v2314, %v2314
      %v2347 = vpack.c.bf16 %v2315, %v2315
      %v2348 = vpack.c.bf16 %v2316, %v2316
      %v2349 = vpack.c.bf16 %v2317, %v2317
      %v2350 = vpack.c.bf16 %v2318, %v2318
      %v2351 = vpack.c.bf16 %v2319, %v2319
      %v2352 = vpack.c.bf16 %v2320, %v2320
      %v2353 = vpack.c.bf16 %v2321, %v2321
      %v2354 = vpack.c.bf16 %v2322, %v2322
      %v2355 = vpack.c.bf16 %v2323, %v2323
      %v2356 = vpack.c.bf16 %v2324, %v2324
      %v2357 = vpack.c.bf16 %v2325, %v2325
      %v2358 = vpack.c.bf16 %v2326, %v2326
      %v2359 = vpack.c.bf16 %v2327, %v2327
      %v2360 = vpack.c.bf16 %v2328, %v2328
      %v2361 = vpack.c.bf16 %v2329, %v2329
      %v2362 = vpack.c.bf16 %v2330, %v2330
      %v2363 = vpack.c.bf16 %v2331, %v2331
      %v2364 = vpack.c.bf16 %v2332, %v2332
      %v2365 = vpack.c.bf16 %v2333, %v2333
      %v2366 = vpack.c.bf16 %v2334, %v2334
      %v2367 = vpack.c.bf16 %v2335, %v2335
      %v2368 = vpack.c.bf16 %v2336, %v2336
      %v2369 = vpack.c.bf16 %v2337, %v2337
      %v2370 = vpack.c.bf16 %v2338, %v2338
      %v2371 = vpack.c.bf16 %v2339, %v2339
      %v2372 = vpack.c.bf16 %v2340, %v2340
      %v2373 = vpack.c.bf16 %v2341, %v2341
      %v2374 = vpack.c.bf16 %v2342, %v2342
      %vm2375 = vcmask 60416
      %2376 = vst.msk [vmem:[%s194] sm:$0xf] %vm2375, %v2343
      %2377 = vst.msk [vmem:[%s194 + $0x4] sm:$0xf] %vm2375, %v2344
      %2378 = vst.msk [vmem:[%s194 + $0x8] sm:$0xf] %vm2375, %v2345
      %2379 = vst.msk [vmem:[%s194 + $0xc] sm:$0xf] %vm2375, %v2346
      %2380 = vst.msk [vmem:[%s194 + $0x10] sm:$0xf] %vm2375, %v2347
      %2381 = vst.msk [vmem:[%s194 + $0x14] sm:$0xf] %vm2375, %v2348
      %2382 = vst.msk [vmem:[%s194 + $0x18] sm:$0xf] %vm2375, %v2349
      %2383 = vst.msk [vmem:[%s194 + $0x1c] sm:$0xf] %vm2375, %v2350
      %2384 = vst.msk [vmem:[%s194 + $0x20] sm:$0xf] %vm2375, %v2351
      %2385 = vst.msk [vmem:[%s194 + $0x24] sm:$0xf] %vm2375, %v2352
      %2386 = vst.msk [vmem:[%s194 + $0x28] sm:$0xf] %vm2375, %v2353
      %2387 = vst.msk [vmem:[%s194 + $0x2c] sm:$0xf] %vm2375, %v2354
      %2388 = vst.msk [vmem:[%s194 + $0x30] sm:$0xf] %vm2375, %v2355
      %2389 = vst.msk [vmem:[%s194 + $0x34] sm:$0xf] %vm2375, %v2356
      %2390 = vst.msk [vmem:[%s194 + $0x38] sm:$0xf] %vm2375, %v2357
      %2391 = vst.msk [vmem:[%s194 + $0x3c] sm:$0xf] %vm2375, %v2358
      %2392 = vst.msk [vmem:[%s194 + $0x40] sm:$0xf] %vm2375, %v2359
      %2393 = vst.msk [vmem:[%s194 + $0x44] sm:$0xf] %vm2375, %v2360
      %2394 = vst.msk [vmem:[%s194 + $0x48] sm:$0xf] %vm2375, %v2361
      %2395 = vst.msk [vmem:[%s194 + $0x4c] sm:$0xf] %vm2375, %v2362
      %2396 = vst.msk [vmem:[%s194 + $0x50] sm:$0xf] %vm2375, %v2363
      %2397 = vst.msk [vmem:[%s194 + $0x54] sm:$0xf] %vm2375, %v2364
      %2398 = vst.msk [vmem:[%s194 + $0x58] sm:$0xf] %vm2375, %v2365
      %2399 = vst.msk [vmem:[%s194 + $0x5c] sm:$0xf] %vm2375, %v2366
      %2400 = vst.msk [vmem:[%s194 + $0x60] sm:$0xf] %vm2375, %v2367
      %2401 = vst.msk [vmem:[%s194 + $0x64] sm:$0xf] %vm2375, %v2368
      %2402 = vst.msk [vmem:[%s194 + $0x68] sm:$0xf] %vm2375, %v2369
      %2403 = vst.msk [vmem:[%s194 + $0x6c] sm:$0xf] %vm2375, %v2370
      %2404 = vst.msk [vmem:[%s194 + $0x70] sm:$0xf] %vm2375, %v2371
      %2405 = vst.msk [vmem:[%s194 + $0x74] sm:$0xf] %vm2375, %v2372
      %2406 = vst.msk [vmem:[%s194 + $0x78] sm:$0xf] %vm2375, %v2373
      %2407 = vst.msk [vmem:[%s194 + $0x7c] sm:$0xf] %vm2375, %v2374
      %s2408 = smul.u32 16, %s19
      %p2409 = scmp.lt.s32.totalorder %s18, 1
      %s2410 = scalar_select %p2409, %s18, 1
      %p2411 = scmp.lt.s32.totalorder %s2408, 15
      %s2412 = scalar_select %p2411, %s2408, 15
      %s2413 = smul.addr %s2412, 2
      %s2414 = smul.addr %s2410, 32
      %s2415 = sadd.s32 %s2413, %s2414
      %s2416 = smul.addr %s2415, 4
      %s2417 = scalar_lea.vmem %s3, %s2416
      // Predicated region
      $region33: #{tpu_custom_call.1} parent=31 // pred_check
        %p2418 = pneg %p114
      $region34: #{tpu_custom_call.1} parent=31 // pred_check_branch
        %2420 = sbr.rel (%p2418) target = $region36
      $region35: #{tpu_custom_call.1} parent=31 // pred_region
        %s2421 = smul.u32 16, %s19
      $region36: #{tpu_custom_call.1} parent=31 // pred_fallthru
        _
    $region32: #{tpu_custom_call.1} parent=5 // pred_fallthru
      _
    %p2422 = scmp.le.s32.totalorder 2, %s9
    // Predicated region
    $region37: #{tpu_custom_call.1} parent=5 // pred_check
      %p2423 = pneg %p2422
    $region38: #{tpu_custom_call.1} parent=5 // pred_check_branch
      %2425 = sbr.rel (%p2423) target = $region40
    $region39: #{tpu_custom_call.1} parent=5 // pred_region
      %s2426 = ssub.s32 %s9, 2
      // Predicated region
      $region41: #{tpu_custom_call.1} parent=39 // pred_check
        %p2427 = pneg %p120
      $region42: #{tpu_custom_call.1} parent=39 // pred_check_branch
        %2429 = sbr.rel (%p2427) target = $region44
      $region43: #{tpu_custom_call.1} parent=39 // pred_region
        %s2430 = smul.u32 16, %s21
        %p2431 = scmp.lt.s32.totalorder %s20, 1
        %s2432 = scalar_select %p2431, %s20, 1
        %p2433 = scmp.lt.s32.totalorder %s2430, 15
        %s2434 = scalar_select %p2433, %s2430, 15
        %s2435 = smul.addr %s2434, 2
        %s2436 = smul.addr %s2432, 32
        %s2437 = sadd.s32 %s2435, %s2436
        %s2438 = smul.addr %s2437, 4
        %s2439 = scalar_lea.vmem %s3, %s2438
      $region44: #{tpu_custom_call.1} parent=39 // pred_fallthru
        _
    $region40: #{tpu_custom_call.1} parent=5 // pred_fallthru
      _
  $region6: #{tpu_custom_call.1} parent=0 // loop_footer
    %s13 = sadd.s32 1, %s9
  $region7: #{tpu_custom_call.1} parent=0 // loop_footer_branch
    %8 = sbr.rel target = $region3
  $region8: #{tpu_custom_call.1} parent=0 // loop_exit
    _

</llo_original>
